<compile_context>
chip_gen: v5e
topology: v5e:2x2
jax: 0.10.0
libtpu: 0.0.40
codegen_flags: <defaults>
</compile_context>

<pallas_src>
import jax
import jax.numpy as jnp
from jax.experimental import pallas as pl
from jax.experimental.pallas import tpu as pltpu

LANE = 128
SUBLANE = 8


def _round_up(x, m):
    return (x + m - 1) // m * m


def _tensorcores_per_device():
    """Heuristic: megacore chips (v4 / v5p / v7x) expose 2 TensorCores per JAX
    device; v5e / v6e expose 1.  Only used to pick the batch-tile size."""
    try:
        kind = jax.devices()[0].device_kind.lower()
    except Exception:
        return 1
    return 2 if any(t in kind for t in ("v7", "7x", "v5p", "v4")) else 1


# ---------------------------------------------------------------------------
# Kernel
# ---------------------------------------------------------------------------
def dnn_kernel(x_ref, w1_ref, b1_ref, w2_ref, b2_ref, w3_ref, b3_ref, o_ref):
    # f32 -> bf16 cast on the VPU (free vs. an extra wrapper-side XLA pass).
    x = x_ref[...].astype(w1_ref.dtype)
    # layer1 + ReLU (MXU matmul, f32 accumulate; bias/ReLU in f32 — v5e VPU has no bf16)
    h1 = jnp.dot(x, w1_ref[...], preferred_element_type=jnp.float32)
    h1 = jnp.maximum(h1 + b1_ref[...], 0.0)
    # layer2 + ReLU
    h2 = jnp.dot(h1.astype(w2_ref.dtype), w2_ref[...],
                 preferred_element_type=jnp.float32)
    h2 = jnp.maximum(h2 + b2_ref[...], 0.0)
    # layer3 (no activation)
    o = jnp.dot(h2.astype(w3_ref.dtype), w3_ref[...],
                preferred_element_type=jnp.float32) + b3_ref[...]
    o_ref[...] = o.astype(o_ref.dtype)


# ---------------------------------------------------------------------------
# One-time parameter preparation (pad to lane-dense shapes + cast to bf16)
# ---------------------------------------------------------------------------
def prepare_params(params, compute_dtype=jnp.bfloat16):
    """Pad feature dims to multiples of 128 and cast weights to the MXU dtype.

    Call ONCE (outside the per-step forward) and reuse; per-call HBM traffic is
    then ~one x read + one output write.  Zero padding is semantics-preserving:
    padded hidden columns give ReLU(0)=0 and multiply zero weight rows in the
    next layer; padded output columns are sliced off by the caller.
    """
    w1, b1, w2, b2, w3, b3 = (params["w1"], params["b1"], params["w2"],
                              params["b2"], params["w3"], params["b3"])
    in_dim, hid = w1.shape
    out_dim = w3.shape[1]
    in_p, hid_p, out_p = (_round_up(d, LANE) for d in (in_dim, hid, out_dim))

    def pad2(a, rows, cols, dtype):
        a = jnp.pad(a, ((0, rows - a.shape[0]), (0, cols - a.shape[1])))
        return a.astype(dtype)

    return dict(
        w1=pad2(w1, in_p, hid_p, compute_dtype),
        b1=pad2(b1, 1, hid_p, jnp.float32),
        w2=pad2(w2, hid_p, hid_p, compute_dtype),
        b2=pad2(b2, 1, hid_p, jnp.float32),
        w3=pad2(w3, hid_p, out_p, compute_dtype),
        b3=pad2(b3, 1, out_p, jnp.float32),
        dims=(in_dim, hid, out_dim),
    )


# ---------------------------------------------------------------------------
# Forward pass
# ---------------------------------------------------------------------------
def dnn_forward(x, prepared, *, tile_b=None, out_dtype=jnp.float32):
    """x: (B, input_size) f32.  prepared: output of prepare_params()."""
    in_dim, hid, out_dim = prepared["dims"]
    w1, b1, w2, b2, w3, b3 = (prepared["w1"], prepared["b1"], prepared["w2"],
                              prepared["b2"], prepared["w3"], prepared["b3"])
    B = x.shape[0]
    assert x.shape[1] == in_dim, "input feature dim mismatch"
    in_p, hid_p = w1.shape
    out_p = w3.shape[1]

    if tile_b is None:
        # Single-TC chips: one big tile (grid==1).  Megacore chips: even grid
        # of length >= 2 so both TensorCores share the parallel batch axis.
        n_tc = _tensorcores_per_device()
        tile_b = _round_up(pl.cdiv(B, n_tc), SUBLANE)
    tile_b = max(SUBLANE, min(tile_b, 512))
    B_p = _round_up(B, tile_b)
    grid = (B_p // tile_b,)

    # Pad x only when actually required (common aligned case stays copy-free).
    if B_p != B or in_p != in_dim:
        x = jnp.pad(x, ((0, B_p - B), (0, in_p - in_dim)))

    # VMEM budget: single-buffered weights + double-buffered x/out tiles +
    # f32 intermediates, with 2x headroom for compiler scratch / layout padding.
    weight_bytes = (w1.size + w2.size + w3.size) * w1.dtype.itemsize
    bias_bytes = (b1.size + b2.size + b3.size) * 4
    io_bytes = (2 * tile_b * in_p * 4
                + 2 * tile_b * out_p * jnp.dtype(out_dtype).itemsize)
    interm_bytes = 3 * tile_b * hid_p * 4
    needed = weight_bytes + bias_bytes + io_bytes + interm_bytes
    vmem_limit = int(min(max(2 * needed, 16 * 2**20), 44 * 2**20))

    flops = 2 * B_p * (in_p * hid_p + hid_p * hid_p + hid_p * out_p)
    bytes_accessed = (B_p * in_p * 4 + weight_bytes + bias_bytes
                      + B_p * out_p * jnp.dtype(out_dtype).itemsize)
    cost = pl.CostEstimate(flops=int(flops), transcendentals=0,
                           bytes_accessed=int(bytes_accessed))

    def run(single_buffer_weights):
        # Constant index_maps: weights/biases are DMA'd into VMEM once and
        # reused across batch tiles; single-buffering halves their footprint.
        wkw = ({"pipeline_mode": pl.Buffered(1)} if single_buffer_weights else {})
        in_specs = [
            pl.BlockSpec((tile_b, in_p), lambda i: (i, 0)),            # x (tiled)
            pl.BlockSpec((in_p, hid_p),  lambda i: (0, 0), **wkw),     # w1
            pl.BlockSpec((1, hid_p),     lambda i: (0, 0), **wkw),     # b1
            pl.BlockSpec((hid_p, hid_p), lambda i: (0, 0), **wkw),     # w2
            pl.BlockSpec((1, hid_p),     lambda i: (0, 0), **wkw),     # b2
            pl.BlockSpec((hid_p, out_p), lambda i: (0, 0), **wkw),     # w3
            pl.BlockSpec((1, out_p),     lambda i: (0, 0), **wkw),     # b3
        ]
        out_spec = pl.BlockSpec((tile_b, out_p), lambda i: (i, 0))
        return pl.pallas_call(
            dnn_kernel,
            out_shape=jax.ShapeDtypeStruct((B_p, out_p), out_dtype),
            grid_spec=pltpu.PrefetchScalarGridSpec(
                num_scalar_prefetch=0,
                grid=grid,
                in_specs=in_specs,
                out_specs=out_spec,
            ),
            compiler_params=pltpu.CompilerParams(
                dimension_semantics=("parallel",),
                vmem_limit_bytes=vmem_limit,
            ),
            cost_estimate=cost,
        )(x, w1, b1, w2, b2, w3, b3)

    try:
        out = run(single_buffer_weights=True)
    except Exception:
        # pipeline_mode=pl.Buffered(1) not supported by this jax build — fall
        # back to the default (double-buffered) pipeline; semantics unchanged.
        out = run(single_buffer_weights=False)

    # Strip batch / output-lane padding only when present.
    if B_p != B or out_p != out_dim:
        out = out[:B, :out_dim]
    return out


# ---------------------------------------------------------------------------
# Parameter init + pure-JAX reference
# ---------------------------------------------------------------------------
def init_params(key, input_size, hidden_size, output_size):
    """Deterministic synthetic parameters (PyTorch-style uniform fan-in init)."""
    ks = jax.random.split(key, 6)

    def lin(kw, kb, fan_in, fan_out):
        bound = 1.0 / jnp.sqrt(fan_in)
        w = jax.random.uniform(kw, (fan_in, fan_out), jnp.float32, -bound, bound)
        b = jax.random.uniform(kb, (1, fan_out), jnp.float32, -bound, bound)
        return w, b

    w1, b1 = lin(ks[0], ks[1], input_size, hidden_size)
    w2, b2 = lin(ks[2], ks[3], hidden_size, hidden_size)
    w3, b3 = lin(ks[4], ks[5], hidden_size, output_size)
    return dict(w1=w1, b1=b1, w2=w2, b2=b2, w3=w3, b3=b3)


def dnn_reference(x, p, compute_dtype=jnp.float32):
    """Pure-JAX reference; compute_dtype mirrors the kernel's matmul precision."""
    def mm(a, w):
        return jnp.dot(a.astype(compute_dtype).astype(jnp.float32),
                       w.astype(compute_dtype).astype(jnp.float32))
    h1 = jnp.maximum(mm(x, p["w1"]) + p["b1"], 0.0)
    h2 = jnp.maximum(mm(h1, p["w2"]) + p["b2"], 0.0)
    return mm(h2, p["w3"]) + p["b3"]


if __name__ == "__main__":
    key = jax.random.PRNGKey(0)
    k_x, k_p, k_x2 = jax.random.split(key, 3)

    input_size, hidden_size, output_size = 32, 64, 16
    params = init_params(k_p, input_size, hidden_size, output_size)
    prepared = prepare_params(params)   # one-time pad + bf16 cast of weights

    # Case 1: 256-row batch — grid==1 on v5e/v6e, two parallel 128-row tiles
    # on megacore chips.
    x_big = jax.random.normal(k_x, (256, input_size), jnp.float32)
    out_big = jax.block_until_ready(dnn_forward(x_big, prepared))
    ref_big = dnn_reference(x_big, params, compute_dtype=jnp.bfloat16)
    assert out_big.shape == (256, output_size)
    assert jnp.allclose(out_big, ref_big, atol=2e-2, rtol=2e-2), "mismatch (big batch)"

    # Case 2: small ragged batch — exercises the padding / slicing path.
    x_small = jax.random.normal(k_x2, (10, input_size), jnp.float32)
    out_small = jax.block_until_ready(dnn_forward(x_small, prepared))
    ref_small = dnn_reference(x_small, params, compute_dtype=jnp.bfloat16)
    assert out_small.shape == (10, output_size)
    assert jnp.allclose(out_small, ref_small, atol=2e-2, rtol=2e-2), "mismatch (ragged batch)"

    print("KERNEL_OK")
</pallas_src>

<mosaic_0001>
module attributes {stable_mosaic.version = 11 : i64} {
  func.func @dnn_kernel(%arg0: i32, %arg1: memref<256x128xf32, #tpu.memory_space<vmem>>, %arg2: memref<128x128xbf16, #tpu.memory_space<vmem>>, %arg3: memref<1x128xf32, #tpu.memory_space<vmem>>, %arg4: memref<128x128xbf16, #tpu.memory_space<vmem>>, %arg5: memref<1x128xf32, #tpu.memory_space<vmem>>, %arg6: memref<128x128xbf16, #tpu.memory_space<vmem>>, %arg7: memref<1x128xf32, #tpu.memory_space<vmem>>, %arg8: memref<256x128xf32, #tpu.memory_space<vmem>>) attributes {dimension_semantics = [#tpu.dimension_semantics<parallel>], iteration_bounds = array<i64: 1>, scalar_prefetch = 0 : i64, scratch_operands = 0 : i64, tpu.core_type = #tpu.core_type<tc>, window_params = [{transform_indices = @transform_0, window_bounds = array<i64: 256, 128>}, {pipeline_mode = #tpu.pipeline_mode<synchronous>, transform_indices = @transform_1, window_bounds = array<i64: 128, 128>}, {pipeline_mode = #tpu.pipeline_mode<synchronous>, transform_indices = @transform_2, window_bounds = array<i64: 1, 128>}, {pipeline_mode = #tpu.pipeline_mode<synchronous>, transform_indices = @transform_3, window_bounds = array<i64: 128, 128>}, {pipeline_mode = #tpu.pipeline_mode<synchronous>, transform_indices = @transform_4, window_bounds = array<i64: 1, 128>}, {pipeline_mode = #tpu.pipeline_mode<synchronous>, transform_indices = @transform_5, window_bounds = array<i64: 128, 128>}, {pipeline_mode = #tpu.pipeline_mode<synchronous>, transform_indices = @transform_6, window_bounds = array<i64: 1, 128>}, {transform_indices = @transform_7, window_bounds = array<i64: 256, 128>}]} {
    %c0 = arith.constant 0 : index
    %c0_0 = arith.constant 0 : index
    %0 = vector.load %arg1[%c0, %c0_0] : memref<256x128xf32, #tpu.memory_space<vmem>>, vector<256x128xf32>
    %1 = arith.truncf %0 : vector<256x128xf32> to vector<256x128xbf16>
    %c0_1 = arith.constant 0 : index
    %c0_2 = arith.constant 0 : index
    %2 = vector.load %arg2[%c0_1, %c0_2] : memref<128x128xbf16, #tpu.memory_space<vmem>>, vector<128x128xbf16>
    %cst = arith.constant dense<0.000000e+00> : vector<256x128xf32>
    %3 = tpu.matmul %1, %2, %cst {dimension_numbers = #tpu.dot_dimension_numbers<[1], [0], [0], [1], [0, 0, 1, 1], [], []>} : vector<256x128xbf16>, vector<128x128xbf16>, vector<256x128xf32> -> vector<256x128xf32>
    %c0_3 = arith.constant 0 : index
    %c0_4 = arith.constant 0 : index
    %4 = vector.load %arg3[%c0_3, %c0_4] : memref<1x128xf32, #tpu.memory_space<vmem>>, vector<1x128xf32>
    %5 = vector.broadcast %4 : vector<1x128xf32> to vector<256x128xf32>
    %6 = arith.addf %3, %5 : vector<256x128xf32>
    %cst_5 = arith.constant 0.000000e+00 : f32
    %7 = vector.broadcast %cst_5 : f32 to vector<256x128xf32>
    %8 = arith.maximumf %6, %7 : vector<256x128xf32>
    %9 = arith.truncf %8 : vector<256x128xf32> to vector<256x128xbf16>
    %c0_6 = arith.constant 0 : index
    %c0_7 = arith.constant 0 : index
    %10 = vector.load %arg4[%c0_6, %c0_7] : memref<128x128xbf16, #tpu.memory_space<vmem>>, vector<128x128xbf16>
    %cst_8 = arith.constant dense<0.000000e+00> : vector<256x128xf32>
    %11 = tpu.matmul %9, %10, %cst_8 {dimension_numbers = #tpu.dot_dimension_numbers<[1], [0], [0], [1], [0, 0, 1, 1], [], []>} : vector<256x128xbf16>, vector<128x128xbf16>, vector<256x128xf32> -> vector<256x128xf32>
    %c0_9 = arith.constant 0 : index
    %c0_10 = arith.constant 0 : index
    %12 = vector.load %arg5[%c0_9, %c0_10] : memref<1x128xf32, #tpu.memory_space<vmem>>, vector<1x128xf32>
    %13 = vector.broadcast %12 : vector<1x128xf32> to vector<256x128xf32>
    %14 = arith.addf %11, %13 : vector<256x128xf32>
    %cst_11 = arith.constant 0.000000e+00 : f32
    %15 = vector.broadcast %cst_11 : f32 to vector<256x128xf32>
    %16 = arith.maximumf %14, %15 : vector<256x128xf32>
    %17 = arith.truncf %16 : vector<256x128xf32> to vector<256x128xbf16>
    %c0_12 = arith.constant 0 : index
    %c0_13 = arith.constant 0 : index
    %18 = vector.load %arg6[%c0_12, %c0_13] : memref<128x128xbf16, #tpu.memory_space<vmem>>, vector<128x128xbf16>
    %cst_14 = arith.constant dense<0.000000e+00> : vector<256x128xf32>
    %19 = tpu.matmul %17, %18, %cst_14 {dimension_numbers = #tpu.dot_dimension_numbers<[1], [0], [0], [1], [0, 0, 1, 1], [], []>} : vector<256x128xbf16>, vector<128x128xbf16>, vector<256x128xf32> -> vector<256x128xf32>
    %c0_15 = arith.constant 0 : index
    %c0_16 = arith.constant 0 : index
    %20 = vector.load %arg7[%c0_15, %c0_16] : memref<1x128xf32, #tpu.memory_space<vmem>>, vector<1x128xf32>
    %21 = vector.broadcast %20 : vector<1x128xf32> to vector<256x128xf32>
    %22 = arith.addf %19, %21 : vector<256x128xf32>
    %c0_17 = arith.constant 0 : index
    %c0_18 = arith.constant 0 : index
    %23 = vector.load %arg8[%c0_17, %c0_18] : memref<256x128xf32, #tpu.memory_space<vmem>>, vector<256x128xf32>
    tpu.vector_store %arg8[%c0_17, %c0_18], %22 {strides = array<i32>} : memref<256x128xf32, #tpu.memory_space<vmem>>, vector<256x128xf32>,
    return
  }
  func.func @transform_0(%arg0: i32) -> (i32, i32) {
    %c0_i32 = arith.constant 0 : i32
    %c0_i32_0 = arith.constant 0 : i32
    return %arg0, %c0_i32 : i32, i32
  }
  func.func @transform_1(%arg0: i32) -> (i32, i32) {
    %c0_i32 = arith.constant 0 : i32
    %c0_i32_0 = arith.constant 0 : i32
    %c0_i32_1 = arith.constant 0 : i32
    return %c0_i32, %c0_i32_0 : i32, i32
  }
  func.func @transform_2(%arg0: i32) -> (i32, i32) {
    %c0_i32 = arith.constant 0 : i32
    %c0_i32_0 = arith.constant 0 : i32
    %c0_i32_1 = arith.constant 0 : i32
    return %c0_i32, %c0_i32_0 : i32, i32
  }
  func.func @transform_3(%arg0: i32) -> (i32, i32) {
    %c0_i32 = arith.constant 0 : i32
    %c0_i32_0 = arith.constant 0 : i32
    %c0_i32_1 = arith.constant 0 : i32
    return %c0_i32, %c0_i32_0 : i32, i32
  }
  func.func @transform_4(%arg0: i32) -> (i32, i32) {
    %c0_i32 = arith.constant 0 : i32
    %c0_i32_0 = arith.constant 0 : i32
    %c0_i32_1 = arith.constant 0 : i32
    return %c0_i32, %c0_i32_0 : i32, i32
  }
  func.func @transform_5(%arg0: i32) -> (i32, i32) {
    %c0_i32 = arith.constant 0 : i32
    %c0_i32_0 = arith.constant 0 : i32
    %c0_i32_1 = arith.constant 0 : i32
    return %c0_i32, %c0_i32_0 : i32, i32
  }
  func.func @transform_6(%arg0: i32) -> (i32, i32) {
    %c0_i32 = arith.constant 0 : i32
    %c0_i32_0 = arith.constant 0 : i32
    %c0_i32_1 = arith.constant 0 : i32
    return %c0_i32, %c0_i32_0 : i32, i32
  }
  func.func @transform_7(%arg0: i32) -> (i32, i32) {
    %c0_i32 = arith.constant 0 : i32
    %c0_i32_0 = arith.constant 0 : i32
    return %arg0, %c0_i32 : i32, i32
  }
}

module attributes {stable_mosaic.version = 11 : i64} {
  func.func @dnn_kernel(%arg0: i32, %arg1: memref<256x128xf32, #tpu.memory_space<vmem>>, %arg2: memref<128x128xbf16, #tpu.memory_space<vmem>>, %arg3: memref<1x128xf32, #tpu.memory_space<vmem>>, %arg4: memref<128x128xbf16, #tpu.memory_space<vmem>>, %arg5: memref<1x128xf32, #tpu.memory_space<vmem>>, %arg6: memref<128x128xbf16, #tpu.memory_space<vmem>>, %arg7: memref<1x128xf32, #tpu.memory_space<vmem>>, %arg8: memref<256x128xf32, #tpu.memory_space<vmem>>) attributes {dimension_semantics = [#tpu.dimension_semantics<parallel>], iteration_bounds = array<i64: 1>, scalar_prefetch = 0 : i64, scratch_operands = 0 : i64, tpu.core_type = #tpu.core_type<tc>, window_params = [{transform_indices = @transform_0, window_bounds = array<i64: 256, 128>}, {pipeline_mode = #tpu.pipeline_mode<synchronous>, transform_indices = @transform_1, window_bounds = array<i64: 128, 128>}, {pipeline_mode = #tpu.pipeline_mode<synchronous>, transform_indices = @transform_2, window_bounds = array<i64: 1, 128>}, {pipeline_mode = #tpu.pipeline_mode<synchronous>, transform_indices = @transform_3, window_bounds = array<i64: 128, 128>}, {pipeline_mode = #tpu.pipeline_mode<synchronous>, transform_indices = @transform_4, window_bounds = array<i64: 1, 128>}, {pipeline_mode = #tpu.pipeline_mode<synchronous>, transform_indices = @transform_5, window_bounds = array<i64: 128, 128>}, {pipeline_mode = #tpu.pipeline_mode<synchronous>, transform_indices = @transform_6, window_bounds = array<i64: 1, 128>}, {transform_indices = @transform_7, window_bounds = array<i64: 256, 128>}]} {
    %c0 = arith.constant 0 : index
    %c0_0 = arith.constant 0 : index
    %0 = vector.load %arg1[%c0, %c0_0] : memref<256x128xf32, #tpu.memory_space<vmem>>, vector<256x128xf32>
    %1 = arith.truncf %0 : vector<256x128xf32> to vector<256x128xbf16>
    %c0_1 = arith.constant 0 : index
    %c0_2 = arith.constant 0 : index
    %2 = vector.load %arg2[%c0_1, %c0_2] : memref<128x128xbf16, #tpu.memory_space<vmem>>, vector<128x128xbf16>
    %cst = arith.constant dense<0.000000e+00> : vector<256x128xf32>
    %3 = tpu.matmul %1, %2, %cst {dimension_numbers = #tpu.dot_dimension_numbers<[1], [0], [0], [1], [0, 0, 1, 1], [], []>} : vector<256x128xbf16>, vector<128x128xbf16>, vector<256x128xf32> -> vector<256x128xf32>
    %c0_3 = arith.constant 0 : index
    %c0_4 = arith.constant 0 : index
    %4 = vector.load %arg3[%c0_3, %c0_4] : memref<1x128xf32, #tpu.memory_space<vmem>>, vector<1x128xf32>
    %5 = vector.broadcast %4 : vector<1x128xf32> to vector<256x128xf32>
    %6 = arith.addf %3, %5 : vector<256x128xf32>
    %cst_5 = arith.constant 0.000000e+00 : f32
    %7 = vector.broadcast %cst_5 : f32 to vector<256x128xf32>
    %8 = arith.maximumf %6, %7 : vector<256x128xf32>
    %9 = arith.truncf %8 : vector<256x128xf32> to vector<256x128xbf16>
    %c0_6 = arith.constant 0 : index
    %c0_7 = arith.constant 0 : index
    %10 = vector.load %arg4[%c0_6, %c0_7] : memref<128x128xbf16, #tpu.memory_space<vmem>>, vector<128x128xbf16>
    %cst_8 = arith.constant dense<0.000000e+00> : vector<256x128xf32>
    %11 = tpu.matmul %9, %10, %cst_8 {dimension_numbers = #tpu.dot_dimension_numbers<[1], [0], [0], [1], [0, 0, 1, 1], [], []>} : vector<256x128xbf16>, vector<128x128xbf16>, vector<256x128xf32> -> vector<256x128xf32>
    %c0_9 = arith.constant 0 : index
    %c0_10 = arith.constant 0 : index
    %12 = vector.load %arg5[%c0_9, %c0_10] : memref<1x128xf32, #tpu.memory_space<vmem>>, vector<1x128xf32>
    %13 = vector.broadcast %12 : vector<1x128xf32> to vector<256x128xf32>
    %14 = arith.addf %11, %13 : vector<256x128xf32>
    %cst_11 = arith.constant 0.000000e+00 : f32
    %15 = vector.broadcast %cst_11 : f32 to vector<256x128xf32>
    %16 = arith.maximumf %14, %15 : vector<256x128xf32>
    %17 = arith.truncf %16 : vector<256x128xf32> to vector<256x128xbf16>
    %c0_12 = arith.constant 0 : index
    %c0_13 = arith.constant 0 : index
    %18 = vector.load %arg6[%c0_12, %c0_13] : memref<128x128xbf16, #tpu.memory_space<vmem>>, vector<128x128xbf16>
    %cst_14 = arith.constant dense<0.000000e+00> : vector<256x128xf32>
    %19 = tpu.matmul %17, %18, %cst_14 {dimension_numbers = #tpu.dot_dimension_numbers<[1], [0], [0], [1], [0, 0, 1, 1], [], []>} : vector<256x128xbf16>, vector<128x128xbf16>, vector<256x128xf32> -> vector<256x128xf32>
    %c0_15 = arith.constant 0 : index
    %c0_16 = arith.constant 0 : index
    %20 = vector.load %arg7[%c0_15, %c0_16] : memref<1x128xf32, #tpu.memory_space<vmem>>, vector<1x128xf32>
    %21 = vector.broadcast %20 : vector<1x128xf32> to vector<256x128xf32>
    %22 = arith.addf %19, %21 : vector<256x128xf32>
    %c0_17 = arith.constant 0 : index
    %c0_18 = arith.constant 0 : index
    %23 = vector.load %arg8[%c0_17, %c0_18] : memref<256x128xf32, #tpu.memory_space<vmem>>, vector<256x128xf32>
    tpu.vector_store %arg8[%c0_17, %c0_18], %22 {strides = array<i32>} : memref<256x128xf32, #tpu.memory_space<vmem>>, vector<256x128xf32>,
    return
  }
  func.func @transform_0(%arg0: i32) -> (i32, i32) {
    %c0_i32 = arith.constant 0 : i32
    %c0_i32_0 = arith.constant 0 : i32
    return %arg0, %c0_i32 : i32, i32
  }
  func.func @transform_1(%arg0: i32) -> (i32, i32) {
    %c0_i32 = arith.constant 0 : i32
    %c0_i32_0 = arith.constant 0 : i32
    %c0_i32_1 = arith.constant 0 : i32
    return %c0_i32, %c0_i32_0 : i32, i32
  }
  func.func @transform_2(%arg0: i32) -> (i32, i32) {
    %c0_i32 = arith.constant 0 : i32
    %c0_i32_0 = arith.constant 0 : i32
    %c0_i32_1 = arith.constant 0 : i32
    return %c0_i32, %c0_i32_0 : i32, i32
  }
  func.func @transform_3(%arg0: i32) -> (i32, i32) {
    %c0_i32 = arith.constant 0 : i32
    %c0_i32_0 = arith.constant 0 : i32
    %c0_i32_1 = arith.constant 0 : i32
    return %c0_i32, %c0_i32_0 : i32, i32
  }
  func.func @transform_4(%arg0: i32) -> (i32, i32) {
    %c0_i32 = arith.constant 0 : i32
    %c0_i32_0 = arith.constant 0 : i32
    %c0_i32_1 = arith.constant 0 : i32
    return %c0_i32, %c0_i32_0 : i32, i32
  }
  func.func @transform_5(%arg0: i32) -> (i32, i32) {
    %c0_i32 = arith.constant 0 : i32
    %c0_i32_0 = arith.constant 0 : i32
    %c0_i32_1 = arith.constant 0 : i32
    return %c0_i32, %c0_i32_0 : i32, i32
  }
  func.func @transform_6(%arg0: i32) -> (i32, i32) {
    %c0_i32 = arith.constant 0 : i32
    %c0_i32_0 = arith.constant 0 : i32
    %c0_i32_1 = arith.constant 0 : i32
    return %c0_i32, %c0_i32_0 : i32, i32
  }
  func.func @transform_7(%arg0: i32) -> (i32, i32) {
    %c0_i32 = arith.constant 0 : i32
    %c0_i32_0 = arith.constant 0 : i32
    return %arg0, %c0_i32 : i32, i32
  }
}

</mosaic_0001>

<llo_original>
// kernel: tpu_custom_call.1
$region0: #{tpu_custom_call.1}
  #allocation0 [shape = 'u32[]', space=smem, size = 0x4, offset = 0x4, fixed_abs, tag = 'smem constant byte address 0x4 - core index']
  #allocation1 [shape = 'u32[72,128]{1,0:T(1,128)}', space=vmem, size = 0x9000, scoped, tag = 'internal scratch']
  %s0 = inlined_call_operand.hbm [shape: f32[256,128], index: 0, kind: input, shape index: {}]
  %s1 = inlined_call_operand.hbm [shape: bf16[128,128], index: 1, kind: input, shape index: {}]
  %s2 = inlined_call_operand.vmem [shape: f32[1,128], index: 2, kind: input, shape index: {}]
  %s3 = inlined_call_operand.hbm [shape: bf16[128,128], index: 3, kind: input, shape index: {}]
  %s4 = inlined_call_operand.vmem [shape: f32[1,128], index: 4, kind: input, shape index: {}]
  %s5 = inlined_call_operand.hbm [shape: bf16[128,128], index: 5, kind: input, shape index: {}]
  %s6 = inlined_call_operand.vmem [shape: f32[1,128], index: 6, kind: input, shape index: {}]
  %s7 = inlined_call_operand.hbm [shape: f32[256,128], index: 7, kind: output, shape index: {}]
  %s8 = sld [smem:[#allocation0]]
  $region54: #{tpu_custom_call.1} parent=0
    _
  %s10 = ssub.s32 1, %s8
  %s11 = scalar_select 0, %s10, %s8
  $region1: #{tpu_custom_call.1} parent=0
    #allocation2 [shape = 'u8[131072]{0}', space=vmem, size = 0x20000, scoped, tag = 'input window, operand 0, single buffered']
    #allocation3 [shape = 's32[1]{0}', space=sflag, size = 0x4, scoped, tag = 'scoped memory for tpu_custom_call.1']
    #allocation4 [shape = 's32[1]{0}', space=sflag, size = 0x4, scoped, tag = 'scoped memory for tpu_custom_call.1']
    #allocation5 [shape = 'u8[32768]{0}', space=vmem, size = 0x8000, scoped, tag = 'input window, operand 1, single buffered']
    #allocation6 [shape = 's32[1]{0}', space=sflag, size = 0x4, scoped, tag = 'scoped memory for tpu_custom_call.1']
    #allocation7 [shape = 'u8[32768]{0}', space=vmem, size = 0x8000, scoped, tag = 'input window, operand 3, single buffered']
    #allocation8 [shape = 'u8[32768]{0}', space=vmem, size = 0x8000, scoped, tag = 'input window, operand 5, single buffered']
    #allocation9 [shape = 's32[1]{0}', space=sflag, size = 0x4, scoped, tag = 'scoped memory for tpu_custom_call.1']
    #allocation10 [shape = 'u8[131072]{0}', space=vmem, size = 0x20000, scoped, tag = 'output window, operand 0, single buffered']
    %12 = vsyncpa [#allocation3], 0
    %13 = vsyncpa [#allocation6], 0
    %14 = vsyncpa [#allocation9], 0
    %15 = vsyncpa [#allocation4], 0
    // Predicated region
    $region2: #{tpu_custom_call.1} parent=1 // pred_check
      _
    $region3: #{tpu_custom_call.1} parent=1 // pred_check_branch
      %17 = sbr.rel (0) target = $region5
    $region4: #{tpu_custom_call.1} parent=1 // pred_region
      %19 = vsyncadd [#allocation3], 0
      %s20 = sshll.u32 %s0, 4
      %s21 = int_to_ptr.hbm [resolvable:$true] %s20
      %s22 = sshll.u32 [#allocation2], 4
      %s23 = int_to_ptr.vmem [resolvable:$true] %s22
      %28 = dma.hbm_to_vmem [thread:$0]  %s21, 4096, %s23, [#allocation3], 128, 128, 8
    $region5: #{tpu_custom_call.1} parent=1 // pred_fallthru
      _
    // Predicated region
    $region6: #{tpu_custom_call.1} parent=1 // pred_check
      _
    $region7: #{tpu_custom_call.1} parent=1 // pred_check_branch
      %30 = sbr.rel (0) target = $region9
    $region8: #{tpu_custom_call.1} parent=1 // pred_region
      %32 = vsyncadd [#allocation6], 0
      %s33 = sshll.u32 %s1, 4
      %s34 = int_to_ptr.hbm [resolvable:$true] %s33
      %s35 = sshll.u32 [#allocation5], 4
      %s36 = int_to_ptr.vmem [resolvable:$true] %s35
      %41 = dma.hbm_to_vmem [thread:$0]  %s34, 1024, %s36, [#allocation6], 64, 64, 4
    $region9: #{tpu_custom_call.1} parent=1 // pred_fallthru
      _
    // Predicated region
    $region10: #{tpu_custom_call.1} parent=1 // pred_check
      _
    $region11: #{tpu_custom_call.1} parent=1 // pred_check_branch
      %43 = sbr.rel (0) target = $region13
    $region12: #{tpu_custom_call.1} parent=1 // pred_region
      _
    $region13: #{tpu_custom_call.1} parent=1 // pred_fallthru
      _
    // Predicated region
    $region14: #{tpu_custom_call.1} parent=1 // pred_check
      _
    $region15: #{tpu_custom_call.1} parent=1 // pred_check_branch
      %45 = sbr.rel (0) target = $region17
    $region16: #{tpu_custom_call.1} parent=1 // pred_region
      %47 = vsyncadd [#allocation6], 0
      %s48 = sshll.u32 %s3, 4
      %s49 = int_to_ptr.hbm [resolvable:$true] %s48
      %s50 = sshll.u32 [#allocation7], 4
      %s51 = int_to_ptr.vmem [resolvable:$true] %s50
      %56 = dma.hbm_to_vmem [thread:$0]  %s49, 1024, %s51, [#allocation6], 64, 64, 4
    $region17: #{tpu_custom_call.1} parent=1 // pred_fallthru
      _
    // Predicated region
    $region18: #{tpu_custom_call.1} parent=1 // pred_check
      _
    $region19: #{tpu_custom_call.1} parent=1 // pred_check_branch
      %58 = sbr.rel (0) target = $region21
    $region20: #{tpu_custom_call.1} parent=1 // pred_region
      _
    $region21: #{tpu_custom_call.1} parent=1 // pred_fallthru
      _
    // Predicated region
    $region22: #{tpu_custom_call.1} parent=1 // pred_check
      _
    $region23: #{tpu_custom_call.1} parent=1 // pred_check_branch
      %60 = sbr.rel (0) target = $region25
    $region24: #{tpu_custom_call.1} parent=1 // pred_region
      %62 = vsyncadd [#allocation9], 0
      %s63 = sshll.u32 %s5, 4
      %s64 = int_to_ptr.hbm [resolvable:$true] %s63
      %s65 = sshll.u32 [#allocation8], 4
      %s66 = int_to_ptr.vmem [resolvable:$true] %s65
      %71 = dma.hbm_to_vmem [thread:$0]  %s64, 1024, %s66, [#allocation9], 64, 64, 4
    $region25: #{tpu_custom_call.1} parent=1 // pred_fallthru
      _
    // Predicated region
    $region26: #{tpu_custom_call.1} parent=1 // pred_check
      _
    $region27: #{tpu_custom_call.1} parent=1 // pred_check_branch
      %73 = sbr.rel (0) target = $region29
    $region28: #{tpu_custom_call.1} parent=1 // pred_region
      _
    $region29: #{tpu_custom_call.1} parent=1 // pred_fallthru
      _
    // Predicated region
    $region30: #{tpu_custom_call.1} parent=1 // pred_check
      _
    $region31: #{tpu_custom_call.1} parent=1 // pred_check_branch
      %75 = sbr.rel (0) target = $region33
    $region32: #{tpu_custom_call.1} parent=1 // pred_region
      %77 = dma.done [#allocation3], 4096
    $region33: #{tpu_custom_call.1} parent=1 // pred_fallthru
      _
    // Predicated region
    $region34: #{tpu_custom_call.1} parent=1 // pred_check
      _
    $region35: #{tpu_custom_call.1} parent=1 // pred_check_branch
      %79 = sbr.rel (0) target = $region37
    $region36: #{tpu_custom_call.1} parent=1 // pred_region
      %81 = dma.done [#allocation6], 1024
    $region37: #{tpu_custom_call.1} parent=1 // pred_fallthru
      _
    // Predicated region
    $region38: #{tpu_custom_call.1} parent=1 // pred_check
      _
    $region39: #{tpu_custom_call.1} parent=1 // pred_check_branch
      %83 = sbr.rel (0) target = $region41
    $region40: #{tpu_custom_call.1} parent=1 // pred_region
      %85 = dma.done [#allocation6], 1024
    $region41: #{tpu_custom_call.1} parent=1 // pred_fallthru
      _
    // Predicated region
    $region42: #{tpu_custom_call.1} parent=1 // pred_check
      _
    $region43: #{tpu_custom_call.1} parent=1 // pred_check_branch
      %87 = sbr.rel (0) target = $region45
    $region44: #{tpu_custom_call.1} parent=1 // pred_region
      %89 = dma.done [#allocation9], 1024
    $region45: #{tpu_custom_call.1} parent=1 // pred_fallthru
      _
    %v90 = vld [vmem:[#allocation2] sm:$0xff]
    %v91 = vld [vmem:[#allocation2 + $0x8] sm:$0xff]
    %v92 = vld [vmem:[#allocation2 + $0x10] sm:$0xff]
    %v93 = vld [vmem:[#allocation2 + $0x18] sm:$0xff]
    %v94 = vld [vmem:[#allocation2 + $0x20] sm:$0xff]
    %v95 = vld [vmem:[#allocation2 + $0x28] sm:$0xff]
    %v96 = vld [vmem:[#allocation2 + $0x30] sm:$0xff]
    %v97 = vld [vmem:[#allocation2 + $0x38] sm:$0xff]
    %v98 = vld [vmem:[#allocation2 + $0x40] sm:$0xff]
    %v99 = vld [vmem:[#allocation2 + $0x48] sm:$0xff]
    %v100 = vld [vmem:[#allocation2 + $0x50] sm:$0xff]
    %v101 = vld [vmem:[#allocation2 + $0x58] sm:$0xff]
    %v102 = vld [vmem:[#allocation2 + $0x60] sm:$0xff]
    %v103 = vld [vmem:[#allocation2 + $0x68] sm:$0xff]
    %v104 = vld [vmem:[#allocation2 + $0x70] sm:$0xff]
    %v105 = vld [vmem:[#allocation2 + $0x78] sm:$0xff]
    %v106 = vld [vmem:[#allocation2 + $0x80] sm:$0xff]
    %v107 = vld [vmem:[#allocation2 + $0x88] sm:$0xff]
    %v108 = vld [vmem:[#allocation2 + $0x90] sm:$0xff]
    %v109 = vld [vmem:[#allocation2 + $0x98] sm:$0xff]
    %v110 = vld [vmem:[#allocation2 + $0xa0] sm:$0xff]
    %v111 = vld [vmem:[#allocation2 + $0xa8] sm:$0xff]
    %v112 = vld [vmem:[#allocation2 + $0xb0] sm:$0xff]
    %v113 = vld [vmem:[#allocation2 + $0xb8] sm:$0xff]
    %v114 = vld [vmem:[#allocation2 + $0xc0] sm:$0xff]
    %v115 = vld [vmem:[#allocation2 + $0xc8] sm:$0xff]
    %v116 = vld [vmem:[#allocation2 + $0xd0] sm:$0xff]
    %v117 = vld [vmem:[#allocation2 + $0xd8] sm:$0xff]
    %v118 = vld [vmem:[#allocation2 + $0xe0] sm:$0xff]
    %v119 = vld [vmem:[#allocation2 + $0xe8] sm:$0xff]
    %v120 = vld [vmem:[#allocation2 + $0xf0] sm:$0xff]
    %v121 = vld [vmem:[#allocation2 + $0xf8] sm:$0xff]
    %v122 = vpack.c.bf16 %v91, %v90
    %v123 = vpack.c.bf16 %v93, %v92
    %v124 = vpack.c.bf16 %v95, %v94
    %v125 = vpack.c.bf16 %v97, %v96
    %v126 = vpack.c.bf16 %v99, %v98
    %v127 = vpack.c.bf16 %v101, %v100
    %v128 = vpack.c.bf16 %v103, %v102
    %v129 = vpack.c.bf16 %v105, %v104
    %v130 = vpack.c.bf16 %v107, %v106
    %v131 = vpack.c.bf16 %v109, %v108
    %v132 = vpack.c.bf16 %v111, %v110
    %v133 = vpack.c.bf16 %v113, %v112
    %v134 = vpack.c.bf16 %v115, %v114
    %v135 = vpack.c.bf16 %v117, %v116
    %v136 = vpack.c.bf16 %v119, %v118
    %v137 = vpack.c.bf16 %v121, %v120
    %v138 = vld [vmem:[#allocation5] sm:$0xf]
    %v139 = vld [vmem:[#allocation5 + $0x4] sm:$0xf]
    %v140 = vld [vmem:[#allocation5 + $0x8] sm:$0xf]
    %v141 = vld [vmem:[#allocation5 + $0xc] sm:$0xf]
    %v142 = vld [vmem:[#allocation5 + $0x10] sm:$0xf]
    %v143 = vld [vmem:[#allocation5 + $0x14] sm:$0xf]
    %v144 = vld [vmem:[#allocation5 + $0x18] sm:$0xf]
    %v145 = vld [vmem:[#allocation5 + $0x1c] sm:$0xf]
    %v146 = vld [vmem:[#allocation5 + $0x20] sm:$0xf]
    %v147 = vld [vmem:[#allocation5 + $0x24] sm:$0xf]
    %v148 = vld [vmem:[#allocation5 + $0x28] sm:$0xf]
    %v149 = vld [vmem:[#allocation5 + $0x2c] sm:$0xf]
    %v150 = vld [vmem:[#allocation5 + $0x30] sm:$0xf]
    %v151 = vld [vmem:[#allocation5 + $0x34] sm:$0xf]
    %v152 = vld [vmem:[#allocation5 + $0x38] sm:$0xf]
    %v153 = vld [vmem:[#allocation5 + $0x3c] sm:$0xf]
    %v154 = vld [vmem:[%s2] sm:$0x1]
    %v156 = vperm.slane %v154, 0
    %v174 = vunpack.c.l.b16 %v138
    %v175 = vunpack.c.l.b16 %v139
    %v176 = vunpack.c.l.b16 %v140
    %v177 = vunpack.c.l.b16 %v141
    %v178 = vunpack.c.l.b16 %v142
    %v179 = vunpack.c.l.b16 %v143
    %v180 = vunpack.c.l.b16 %v144
    %v181 = vunpack.c.l.b16 %v145
    %v182 = vunpack.c.l.b16 %v146
    %v183 = vunpack.c.l.b16 %v147
    %v184 = vunpack.c.l.b16 %v148
    %v185 = vunpack.c.l.b16 %v149
    %v186 = vunpack.c.l.b16 %v150
    %v187 = vunpack.c.l.b16 %v151
    %v188 = vunpack.c.l.b16 %v152
    %v189 = vunpack.c.l.b16 %v153
    %v190 = vpack.c.b16 %v175, %v174
    %v191 = vpack.c.b16 %v177, %v176
    %v192 = vpack.c.b16 %v179, %v178
    %v193 = vpack.c.b16 %v181, %v180
    %v194 = vpack.c.b16 %v183, %v182
    %v195 = vpack.c.b16 %v185, %v184
    %v196 = vpack.c.b16 %v187, %v186
    %v197 = vpack.c.b16 %v189, %v188
    %206 = vmatpush.bf16.msra.mxu0 %v197
    %207 = vmatpush.bf16.msra.mxu0 %v196
    %208 = vmatpush.bf16.msra.mxu0 %v195
    %209 = vmatpush.bf16.msra.mxu0 %v194
    %210 = vmatpush.bf16.msra.mxu0 %v193
    %211 = vmatpush.bf16.msra.mxu0 %v192
    %212 = vmatpush.bf16.msra.mxu0 %v191
    %213 = vmatpush.bf16.msra.mxu0 %v190
    %214 = vmatmul.bf16.gmra.mxu0 %v122
    %v215 = vpop.f32.mrf.mxu0
    %v216 = vadd.f32 %v156, %v215
    %v217 = vpop.f32.mrf.mxu0
    %v218 = vadd.f32 %v156, %v217
    %219 = vmatmul.bf16.gmra.mxu0 %v123
    %v220 = vpop.f32.mrf.mxu0
    %v221 = vadd.f32 %v156, %v220
    %v222 = vpop.f32.mrf.mxu0
    %v223 = vadd.f32 %v156, %v222
    %224 = vmatmul.bf16.gmra.mxu0 %v124
    %v225 = vpop.f32.mrf.mxu0
    %v226 = vadd.f32 %v156, %v225
    %v227 = vpop.f32.mrf.mxu0
    %v228 = vadd.f32 %v156, %v227
    %229 = vmatmul.bf16.gmra.mxu0 %v125
    %v230 = vpop.f32.mrf.mxu0
    %v231 = vadd.f32 %v156, %v230
    %v232 = vpop.f32.mrf.mxu0
    %v233 = vadd.f32 %v156, %v232
    %234 = vmatmul.bf16.gmra.mxu0 %v126
    %v235 = vpop.f32.mrf.mxu0
    %v236 = vadd.f32 %v156, %v235
    %v237 = vpop.f32.mrf.mxu0
    %v238 = vadd.f32 %v156, %v237
    %239 = vmatmul.bf16.gmra.mxu0 %v127
    %v240 = vpop.f32.mrf.mxu0
    %v241 = vadd.f32 %v156, %v240
    %v242 = vpop.f32.mrf.mxu0
    %v243 = vadd.f32 %v156, %v242
    %244 = vmatmul.bf16.gmra.mxu0 %v128
    %v245 = vpop.f32.mrf.mxu0
    %v246 = vadd.f32 %v156, %v245
    %v247 = vpop.f32.mrf.mxu0
    %v248 = vadd.f32 %v156, %v247
    %249 = vmatmul.bf16.gmra.mxu0 %v129
    %v250 = vpop.f32.mrf.mxu0
    %v251 = vadd.f32 %v156, %v250
    %v252 = vpop.f32.mrf.mxu0
    %v253 = vadd.f32 %v156, %v252
    %254 = vmatmul.bf16.gmra.mxu0 %v130
    %v255 = vpop.f32.mrf.mxu0
    %v256 = vadd.f32 %v156, %v255
    %v257 = vpop.f32.mrf.mxu0
    %v258 = vadd.f32 %v156, %v257
    %259 = vmatmul.bf16.gmra.mxu0 %v131
    %v260 = vpop.f32.mrf.mxu0
    %v261 = vadd.f32 %v156, %v260
    %v262 = vpop.f32.mrf.mxu0
    %v263 = vadd.f32 %v156, %v262
    %264 = vmatmul.bf16.gmra.mxu0 %v132
    %v265 = vpop.f32.mrf.mxu0
    %v266 = vadd.f32 %v156, %v265
    %v267 = vpop.f32.mrf.mxu0
    %v268 = vadd.f32 %v156, %v267
    %269 = vmatmul.bf16.gmra.mxu0 %v133
    %v270 = vpop.f32.mrf.mxu0
    %v271 = vadd.f32 %v156, %v270
    %v272 = vpop.f32.mrf.mxu0
    %v273 = vadd.f32 %v156, %v272
    %274 = vmatmul.bf16.gmra.mxu0 %v134
    %v275 = vpop.f32.mrf.mxu0
    %v276 = vadd.f32 %v156, %v275
    %v277 = vpop.f32.mrf.mxu0
    %v278 = vadd.f32 %v156, %v277
    %279 = vmatmul.bf16.gmra.mxu0 %v135
    %v280 = vpop.f32.mrf.mxu0
    %v281 = vadd.f32 %v156, %v280
    %v282 = vpop.f32.mrf.mxu0
    %v283 = vadd.f32 %v156, %v282
    %284 = vmatmul.bf16.gmra.mxu0 %v136
    %v285 = vpop.f32.mrf.mxu0
    %v286 = vadd.f32 %v156, %v285
    %v287 = vpop.f32.mrf.mxu0
    %v288 = vadd.f32 %v156, %v287
    %289 = vmatmul.bf16.gmra.mxu0 %v137
    %v290 = vpop.f32.mrf.mxu0
    %v291 = vadd.f32 %v156, %v290
    %v292 = vpop.f32.mrf.mxu0
    %v293 = vadd.f32 %v156, %v292
    %294 = vdwg.mxu0
    %v295 = vmax.f32 %v216, 0.0
    %v296 = vmax.f32 %v218, 0.0
    %v297 = vmax.f32 %v221, 0.0
    %v298 = vmax.f32 %v223, 0.0
    %v299 = vmax.f32 %v226, 0.0
    %v300 = vmax.f32 %v228, 0.0
    %v301 = vmax.f32 %v231, 0.0
    %v302 = vmax.f32 %v233, 0.0
    %v303 = vmax.f32 %v236, 0.0
    %v304 = vmax.f32 %v238, 0.0
    %v305 = vmax.f32 %v241, 0.0
    %v306 = vmax.f32 %v243, 0.0
    %v307 = vmax.f32 %v246, 0.0
    %v308 = vmax.f32 %v248, 0.0
    %v309 = vmax.f32 %v251, 0.0
    %v310 = vmax.f32 %v253, 0.0
    %v311 = vmax.f32 %v256, 0.0
    %v312 = vmax.f32 %v258, 0.0
    %v313 = vmax.f32 %v261, 0.0
    %v314 = vmax.f32 %v263, 0.0
    %v315 = vmax.f32 %v266, 0.0
    %v316 = vmax.f32 %v268, 0.0
    %v317 = vmax.f32 %v271, 0.0
    %v318 = vmax.f32 %v273, 0.0
    %v319 = vmax.f32 %v276, 0.0
    %v320 = vmax.f32 %v278, 0.0
    %v321 = vmax.f32 %v281, 0.0
    %v322 = vmax.f32 %v283, 0.0
    %v323 = vmax.f32 %v286, 0.0
    %v324 = vmax.f32 %v288, 0.0
    %v325 = vmax.f32 %v291, 0.0
    %v326 = vmax.f32 %v293, 0.0
    %v327 = vpack.c.bf16 %v296, %v295
    %v328 = vpack.c.bf16 %v298, %v297
    %v329 = vpack.c.bf16 %v300, %v299
    %v330 = vpack.c.bf16 %v302, %v301
    %v331 = vpack.c.bf16 %v304, %v303
    %v332 = vpack.c.bf16 %v306, %v305
    %v333 = vpack.c.bf16 %v308, %v307
    %v334 = vpack.c.bf16 %v310, %v309
    %v335 = vpack.c.bf16 %v312, %v311
    %v336 = vpack.c.bf16 %v314, %v313
    %v337 = vpack.c.bf16 %v316, %v315
    %v338 = vpack.c.bf16 %v318, %v317
    %v339 = vpack.c.bf16 %v320, %v319
    %v340 = vpack.c.bf16 %v322, %v321
    %v341 = vpack.c.bf16 %v324, %v323
    %v342 = vpack.c.bf16 %v326, %v325
    %v343 = vld [vmem:[#allocation7] sm:$0xf]
    %v344 = vld [vmem:[#allocation7 + $0x4] sm:$0xf]
    %v345 = vld [vmem:[#allocation7 + $0x8] sm:$0xf]
    %v346 = vld [vmem:[#allocation7 + $0xc] sm:$0xf]
    %v347 = vld [vmem:[#allocation7 + $0x10] sm:$0xf]
    %v348 = vld [vmem:[#allocation7 + $0x14] sm:$0xf]
    %v349 = vld [vmem:[#allocation7 + $0x18] sm:$0xf]
    %v350 = vld [vmem:[#allocation7 + $0x1c] sm:$0xf]
    %v351 = vld [vmem:[#allocation7 + $0x20] sm:$0xf]
    %v352 = vld [vmem:[#allocation7 + $0x24] sm:$0xf]
    %v353 = vld [vmem:[#allocation7 + $0x28] sm:$0xf]
    %v354 = vld [vmem:[#allocation7 + $0x2c] sm:$0xf]
    %v355 = vld [vmem:[#allocation7 + $0x30] sm:$0xf]
    %v356 = vld [vmem:[#allocation7 + $0x34] sm:$0xf]
    %v357 = vld [vmem:[#allocation7 + $0x38] sm:$0xf]
    %v358 = vld [vmem:[#allocation7 + $0x3c] sm:$0xf]
    %v359 = vld [vmem:[%s4] sm:$0x1]
    %v361 = vperm.slane %v359, 0
    %v379 = vunpack.c.l.b16 %v343
    %v380 = vunpack.c.l.b16 %v344
    %v381 = vunpack.c.l.b16 %v345
    %v382 = vunpack.c.l.b16 %v346
    %v383 = vunpack.c.l.b16 %v347
    %v384 = vunpack.c.l.b16 %v348
    %v385 = vunpack.c.l.b16 %v349
    %v386 = vunpack.c.l.b16 %v350
    %v387 = vunpack.c.l.b16 %v351
    %v388 = vunpack.c.l.b16 %v352
    %v389 = vunpack.c.l.b16 %v353
    %v390 = vunpack.c.l.b16 %v354
    %v391 = vunpack.c.l.b16 %v355
    %v392 = vunpack.c.l.b16 %v356
    %v393 = vunpack.c.l.b16 %v357
    %v394 = vunpack.c.l.b16 %v358
    %v395 = vpack.c.b16 %v380, %v379
    %v396 = vpack.c.b16 %v382, %v381
    %v397 = vpack.c.b16 %v384, %v383
    %v398 = vpack.c.b16 %v386, %v385
    %v399 = vpack.c.b16 %v388, %v387
    %v400 = vpack.c.b16 %v390, %v389
    %v401 = vpack.c.b16 %v392, %v391
    %v402 = vpack.c.b16 %v394, %v393
    %411 = vmatpush.bf16.msra.mxu0 %v402
    %412 = vmatpush.bf16.msra.mxu0 %v401
    %413 = vmatpush.bf16.msra.mxu0 %v400
    %414 = vmatpush.bf16.msra.mxu0 %v399
    %415 = vmatpush.bf16.msra.mxu0 %v398
    %416 = vmatpush.bf16.msra.mxu0 %v397
    %417 = vmatpush.bf16.msra.mxu0 %v396
    %418 = vmatpush.bf16.msra.mxu0 %v395
    %419 = vmatmul.bf16.gmra.mxu0 %v327
    %v420 = vpop.f32.mrf.mxu0
    %v421 = vadd.f32 %v361, %v420
    %v422 = vpop.f32.mrf.mxu0
    %v423 = vadd.f32 %v361, %v422
    %424 = vmatmul.bf16.gmra.mxu0 %v328
    %v425 = vpop.f32.mrf.mxu0
    %v426 = vadd.f32 %v361, %v425
    %v427 = vpop.f32.mrf.mxu0
    %v428 = vadd.f32 %v361, %v427
    %429 = vmatmul.bf16.gmra.mxu0 %v329
    %v430 = vpop.f32.mrf.mxu0
    %v431 = vadd.f32 %v361, %v430
    %v432 = vpop.f32.mrf.mxu0
    %v433 = vadd.f32 %v361, %v432
    %434 = vmatmul.bf16.gmra.mxu0 %v330
    %v435 = vpop.f32.mrf.mxu0
    %v436 = vadd.f32 %v361, %v435
    %v437 = vpop.f32.mrf.mxu0
    %v438 = vadd.f32 %v361, %v437
    %439 = vmatmul.bf16.gmra.mxu0 %v331
    %v440 = vpop.f32.mrf.mxu0
    %v441 = vadd.f32 %v361, %v440
    %v442 = vpop.f32.mrf.mxu0
    %v443 = vadd.f32 %v361, %v442
    %444 = vmatmul.bf16.gmra.mxu0 %v332
    %v445 = vpop.f32.mrf.mxu0
    %v446 = vadd.f32 %v361, %v445
    %v447 = vpop.f32.mrf.mxu0
    %v448 = vadd.f32 %v361, %v447
    %449 = vmatmul.bf16.gmra.mxu0 %v333
    %v450 = vpop.f32.mrf.mxu0
    %v451 = vadd.f32 %v361, %v450
    %v452 = vpop.f32.mrf.mxu0
    %v453 = vadd.f32 %v361, %v452
    %454 = vmatmul.bf16.gmra.mxu0 %v334
    %v455 = vpop.f32.mrf.mxu0
    %v456 = vadd.f32 %v361, %v455
    %v457 = vpop.f32.mrf.mxu0
    %v458 = vadd.f32 %v361, %v457
    %459 = vmatmul.bf16.gmra.mxu0 %v335
    %v460 = vpop.f32.mrf.mxu0
    %v461 = vadd.f32 %v361, %v460
    %v462 = vpop.f32.mrf.mxu0
    %v463 = vadd.f32 %v361, %v462
    %464 = vmatmul.bf16.gmra.mxu0 %v336
    %v465 = vpop.f32.mrf.mxu0
    %v466 = vadd.f32 %v361, %v465
    %v467 = vpop.f32.mrf.mxu0
    %v468 = vadd.f32 %v361, %v467
    %469 = vmatmul.bf16.gmra.mxu0 %v337
    %v470 = vpop.f32.mrf.mxu0
    %v471 = vadd.f32 %v361, %v470
    %v472 = vpop.f32.mrf.mxu0
    %v473 = vadd.f32 %v361, %v472
    %474 = vmatmul.bf16.gmra.mxu0 %v338
    %v475 = vpop.f32.mrf.mxu0
    %v476 = vadd.f32 %v361, %v475
    %v477 = vpop.f32.mrf.mxu0
    %v478 = vadd.f32 %v361, %v477
    %479 = vmatmul.bf16.gmra.mxu0 %v339
    %v480 = vpop.f32.mrf.mxu0
    %v481 = vadd.f32 %v361, %v480
    %v482 = vpop.f32.mrf.mxu0
    %v483 = vadd.f32 %v361, %v482
    %484 = vmatmul.bf16.gmra.mxu0 %v340
    %v485 = vpop.f32.mrf.mxu0
    %v486 = vadd.f32 %v361, %v485
    %v487 = vpop.f32.mrf.mxu0
    %v488 = vadd.f32 %v361, %v487
    %489 = vmatmul.bf16.gmra.mxu0 %v341
    %v490 = vpop.f32.mrf.mxu0
    %v491 = vadd.f32 %v361, %v490
    %v492 = vpop.f32.mrf.mxu0
    %v493 = vadd.f32 %v361, %v492
    %494 = vmatmul.bf16.gmra.mxu0 %v342
    %v495 = vpop.f32.mrf.mxu0
    %v496 = vadd.f32 %v361, %v495
    %v497 = vpop.f32.mrf.mxu0
    %v498 = vadd.f32 %v361, %v497
    %499 = vdwg.mxu0
    %v500 = vmax.f32 %v421, 0.0
    %v501 = vmax.f32 %v423, 0.0
    %v502 = vmax.f32 %v426, 0.0
    %v503 = vmax.f32 %v428, 0.0
    %v504 = vmax.f32 %v431, 0.0
    %v505 = vmax.f32 %v433, 0.0
    %v506 = vmax.f32 %v436, 0.0
    %v507 = vmax.f32 %v438, 0.0
    %v508 = vmax.f32 %v441, 0.0
    %v509 = vmax.f32 %v443, 0.0
    %v510 = vmax.f32 %v446, 0.0
    %v511 = vmax.f32 %v448, 0.0
    %v512 = vmax.f32 %v451, 0.0
    %v513 = vmax.f32 %v453, 0.0
    %v514 = vmax.f32 %v456, 0.0
    %v515 = vmax.f32 %v458, 0.0
    %v516 = vmax.f32 %v461, 0.0
    %v517 = vmax.f32 %v463, 0.0
    %v518 = vmax.f32 %v466, 0.0
    %v519 = vmax.f32 %v468, 0.0
    %v520 = vmax.f32 %v471, 0.0
    %v521 = vmax.f32 %v473, 0.0
    %v522 = vmax.f32 %v476, 0.0
    %v523 = vmax.f32 %v478, 0.0
    %v524 = vmax.f32 %v481, 0.0
    %v525 = vmax.f32 %v483, 0.0
    %v526 = vmax.f32 %v486, 0.0
    %v527 = vmax.f32 %v488, 0.0
    %v528 = vmax.f32 %v491, 0.0
    %v529 = vmax.f32 %v493, 0.0
    %v530 = vmax.f32 %v496, 0.0
    %v531 = vmax.f32 %v498, 0.0
    %v532 = vpack.c.bf16 %v501, %v500
    %v533 = vpack.c.bf16 %v503, %v502
    %v534 = vpack.c.bf16 %v505, %v504
    %v535 = vpack.c.bf16 %v507, %v506
    %v536 = vpack.c.bf16 %v509, %v508
    %v537 = vpack.c.bf16 %v511, %v510
    %v538 = vpack.c.bf16 %v513, %v512
    %v539 = vpack.c.bf16 %v515, %v514
    %v540 = vpack.c.bf16 %v517, %v516
    %v541 = vpack.c.bf16 %v519, %v518
    %v542 = vpack.c.bf16 %v521, %v520
    %v543 = vpack.c.bf16 %v523, %v522
    %v544 = vpack.c.bf16 %v525, %v524
    %v545 = vpack.c.bf16 %v527, %v526
    %v546 = vpack.c.bf16 %v529, %v528
    %v547 = vpack.c.bf16 %v531, %v530
    %v548 = vld [vmem:[#allocation8] sm:$0xf]
    %v549 = vld [vmem:[#allocation8 + $0x4] sm:$0xf]
    %v550 = vld [vmem:[#allocation8 + $0x8] sm:$0xf]
    %v551 = vld [vmem:[#allocation8 + $0xc] sm:$0xf]
    %v552 = vld [vmem:[#allocation8 + $0x10] sm:$0xf]
    %v553 = vld [vmem:[#allocation8 + $0x14] sm:$0xf]
    %v554 = vld [vmem:[#allocation8 + $0x18] sm:$0xf]
    %v555 = vld [vmem:[#allocation8 + $0x1c] sm:$0xf]
    %v556 = vld [vmem:[#allocation8 + $0x20] sm:$0xf]
    %v557 = vld [vmem:[#allocation8 + $0x24] sm:$0xf]
    %v558 = vld [vmem:[#allocation8 + $0x28] sm:$0xf]
    %v559 = vld [vmem:[#allocation8 + $0x2c] sm:$0xf]
    %v560 = vld [vmem:[#allocation8 + $0x30] sm:$0xf]
    %v561 = vld [vmem:[#allocation8 + $0x34] sm:$0xf]
    %v562 = vld [vmem:[#allocation8 + $0x38] sm:$0xf]
    %v563 = vld [vmem:[#allocation8 + $0x3c] sm:$0xf]
    %v564 = vld [vmem:[%s6] sm:$0x1]
    %v566 = vperm.slane %v564, 0
    %v584 = vunpack.c.l.b16 %v548
    %v585 = vunpack.c.l.b16 %v549
    %v586 = vunpack.c.l.b16 %v550
    %v587 = vunpack.c.l.b16 %v551
    %v588 = vunpack.c.l.b16 %v552
    %v589 = vunpack.c.l.b16 %v553
    %v590 = vunpack.c.l.b16 %v554
    %v591 = vunpack.c.l.b16 %v555
    %v592 = vunpack.c.l.b16 %v556
    %v593 = vunpack.c.l.b16 %v557
    %v594 = vunpack.c.l.b16 %v558
    %v595 = vunpack.c.l.b16 %v559
    %v596 = vunpack.c.l.b16 %v560
    %v597 = vunpack.c.l.b16 %v561
    %v598 = vunpack.c.l.b16 %v562
    %v599 = vunpack.c.l.b16 %v563
    %v600 = vpack.c.b16 %v585, %v584
    %v601 = vpack.c.b16 %v587, %v586
    %v602 = vpack.c.b16 %v589, %v588
    %v603 = vpack.c.b16 %v591, %v590
    %v604 = vpack.c.b16 %v593, %v592
    %v605 = vpack.c.b16 %v595, %v594
    %v606 = vpack.c.b16 %v597, %v596
    %v607 = vpack.c.b16 %v599, %v598
    %616 = vmatpush.bf16.msra.mxu0 %v607
    %617 = vmatpush.bf16.msra.mxu0 %v606
    %618 = vmatpush.bf16.msra.mxu0 %v605
    %619 = vmatpush.bf16.msra.mxu0 %v604
    %620 = vmatpush.bf16.msra.mxu0 %v603
    %621 = vmatpush.bf16.msra.mxu0 %v602
    %622 = vmatpush.bf16.msra.mxu0 %v601
    %623 = vmatpush.bf16.msra.mxu0 %v600
    %624 = vmatmul.bf16.gmra.mxu0 %v532
    %v625 = vpop.f32.mrf.mxu0
    %v626 = vadd.f32 %v566, %v625
    %v627 = vpop.f32.mrf.mxu0
    %v628 = vadd.f32 %v566, %v627
    %629 = vmatmul.bf16.gmra.mxu0 %v533
    %v630 = vpop.f32.mrf.mxu0
    %v631 = vadd.f32 %v566, %v630
    %v632 = vpop.f32.mrf.mxu0
    %v633 = vadd.f32 %v566, %v632
    %634 = vmatmul.bf16.gmra.mxu0 %v534
    %v635 = vpop.f32.mrf.mxu0
    %v636 = vadd.f32 %v566, %v635
    %v637 = vpop.f32.mrf.mxu0
    %v638 = vadd.f32 %v566, %v637
    %639 = vmatmul.bf16.gmra.mxu0 %v535
    %v640 = vpop.f32.mrf.mxu0
    %v641 = vadd.f32 %v566, %v640
    %v642 = vpop.f32.mrf.mxu0
    %v643 = vadd.f32 %v566, %v642
    %644 = vmatmul.bf16.gmra.mxu0 %v536
    %v645 = vpop.f32.mrf.mxu0
    %v646 = vadd.f32 %v566, %v645
    %v647 = vpop.f32.mrf.mxu0
    %v648 = vadd.f32 %v566, %v647
    %649 = vmatmul.bf16.gmra.mxu0 %v537
    %v650 = vpop.f32.mrf.mxu0
    %v651 = vadd.f32 %v566, %v650
    %v652 = vpop.f32.mrf.mxu0
    %v653 = vadd.f32 %v566, %v652
    %654 = vmatmul.bf16.gmra.mxu0 %v538
    %v655 = vpop.f32.mrf.mxu0
    %v656 = vadd.f32 %v566, %v655
    %v657 = vpop.f32.mrf.mxu0
    %v658 = vadd.f32 %v566, %v657
    %659 = vmatmul.bf16.gmra.mxu0 %v539
    %v660 = vpop.f32.mrf.mxu0
    %v661 = vadd.f32 %v566, %v660
    %v662 = vpop.f32.mrf.mxu0
    %v663 = vadd.f32 %v566, %v662
    %664 = vmatmul.bf16.gmra.mxu0 %v540
    %v665 = vpop.f32.mrf.mxu0
    %v666 = vadd.f32 %v566, %v665
    %v667 = vpop.f32.mrf.mxu0
    %v668 = vadd.f32 %v566, %v667
    %669 = vmatmul.bf16.gmra.mxu0 %v541
    %v670 = vpop.f32.mrf.mxu0
    %v671 = vadd.f32 %v566, %v670
    %v672 = vpop.f32.mrf.mxu0
    %v673 = vadd.f32 %v566, %v672
    %674 = vmatmul.bf16.gmra.mxu0 %v542
    %v675 = vpop.f32.mrf.mxu0
    %v676 = vadd.f32 %v566, %v675
    %v677 = vpop.f32.mrf.mxu0
    %v678 = vadd.f32 %v566, %v677
    %679 = vmatmul.bf16.gmra.mxu0 %v543
    %v680 = vpop.f32.mrf.mxu0
    %v681 = vadd.f32 %v566, %v680
    %v682 = vpop.f32.mrf.mxu0
    %v683 = vadd.f32 %v566, %v682
    %684 = vmatmul.bf16.gmra.mxu0 %v544
    %v685 = vpop.f32.mrf.mxu0
    %v686 = vadd.f32 %v566, %v685
    %v687 = vpop.f32.mrf.mxu0
    %v688 = vadd.f32 %v566, %v687
    %689 = vmatmul.bf16.gmra.mxu0 %v545
    %v690 = vpop.f32.mrf.mxu0
    %v691 = vadd.f32 %v566, %v690
    %v692 = vpop.f32.mrf.mxu0
    %v693 = vadd.f32 %v566, %v692
    %694 = vmatmul.bf16.gmra.mxu0 %v546
    %v695 = vpop.f32.mrf.mxu0
    %v696 = vadd.f32 %v566, %v695
    %v697 = vpop.f32.mrf.mxu0
    %v698 = vadd.f32 %v566, %v697
    %699 = vmatmul.bf16.gmra.mxu0 %v547
    %v700 = vpop.f32.mrf.mxu0
    %v701 = vadd.f32 %v566, %v700
    %v702 = vpop.f32.mrf.mxu0
    %v703 = vadd.f32 %v566, %v702
    %704 = vdwg.mxu0
    %705 = vst [vmem:[#allocation10] sm:$0xff] %v626
    %706 = vst [vmem:[#allocation10 + $0x8] sm:$0xff] %v628
    %707 = vst [vmem:[#allocation10 + $0x10] sm:$0xff] %v631
    %708 = vst [vmem:[#allocation10 + $0x18] sm:$0xff] %v633
    %709 = vst [vmem:[#allocation10 + $0x20] sm:$0xff] %v636
    %710 = vst [vmem:[#allocation10 + $0x28] sm:$0xff] %v638
    %711 = vst [vmem:[#allocation10 + $0x30] sm:$0xff] %v641
    %712 = vst [vmem:[#allocation10 + $0x38] sm:$0xff] %v643
    %713 = vst [vmem:[#allocation10 + $0x40] sm:$0xff] %v646
    %714 = vst [vmem:[#allocation10 + $0x48] sm:$0xff] %v648
    %715 = vst [vmem:[#allocation10 + $0x50] sm:$0xff] %v651
    %716 = vst [vmem:[#allocation10 + $0x58] sm:$0xff] %v653
    %717 = vst [vmem:[#allocation10 + $0x60] sm:$0xff] %v656
    %718 = vst [vmem:[#allocation10 + $0x68] sm:$0xff] %v658
    %719 = vst [vmem:[#allocation10 + $0x70] sm:$0xff] %v661
    %720 = vst [vmem:[#allocation10 + $0x78] sm:$0xff] %v663
    %721 = vst [vmem:[#allocation10 + $0x80] sm:$0xff] %v666
    %722 = vst [vmem:[#allocation10 + $0x88] sm:$0xff] %v668
    %723 = vst [vmem:[#allocation10 + $0x90] sm:$0xff] %v671
    %724 = vst [vmem:[#allocation10 + $0x98] sm:$0xff] %v673
    %725 = vst [vmem:[#allocation10 + $0xa0] sm:$0xff] %v676
    %726 = vst [vmem:[#allocation10 + $0xa8] sm:$0xff] %v678
    %727 = vst [vmem:[#allocation10 + $0xb0] sm:$0xff] %v681
    %728 = vst [vmem:[#allocation10 + $0xb8] sm:$0xff] %v683
    %729 = vst [vmem:[#allocation10 + $0xc0] sm:$0xff] %v686
    %730 = vst [vmem:[#allocation10 + $0xc8] sm:$0xff] %v688
    %731 = vst [vmem:[#allocation10 + $0xd0] sm:$0xff] %v691
    %732 = vst [vmem:[#allocation10 + $0xd8] sm:$0xff] %v693
    %733 = vst [vmem:[#allocation10 + $0xe0] sm:$0xff] %v696
    %734 = vst [vmem:[#allocation10 + $0xe8] sm:$0xff] %v698
    %735 = vst [vmem:[#allocation10 + $0xf0] sm:$0xff] %v701
    %736 = vst [vmem:[#allocation10 + $0xf8] sm:$0xff] %v703
    // Predicated region
    $region46: #{tpu_custom_call.1} parent=1 // pred_check
      _
    $region47: #{tpu_custom_call.1} parent=1 // pred_check_branch
      %738 = sbr.rel (0) target = $region49
    $region48: #{tpu_custom_call.1} parent=1 // pred_region
      %740 = vsyncadd [#allocation4], 0
      %s741 = sshll.u32 [#allocation10], 4
      %s742 = int_to_ptr.vmem [resolvable:$true] %s741
      %s743 = sshll.u32 %s7, 4
      %s744 = int_to_ptr.hbm [resolvable:$true] %s743
      %749 = dma.vmem_to_hbm [thread:$0]  %s742, 4096, %s744, [#allocation4], 128, 128, 8
    $region49: #{tpu_custom_call.1} parent=1 // pred_fallthru
      _
    // Predicated region
    $region50: #{tpu_custom_call.1} parent=1 // pred_check
      _
    $region51: #{tpu_custom_call.1} parent=1 // pred_check_branch
      %751 = sbr.rel (0) target = $region53
    $region52: #{tpu_custom_call.1} parent=1 // pred_region
      %753 = dma.done [#allocation4], 4096
    $region53: #{tpu_custom_call.1} parent=1 // pred_fallthru
      _
    %754 = vsyncpa [#allocation3], 1
    %755 = vsyncpa [#allocation6], 1
    %756 = vsyncpa [#allocation9], 1
    %757 = vsyncpa [#allocation4], 1

// kernel: tpu_custom_call.1
$region0: #{tpu_custom_call.1}
  #allocation0 [shape = 'u32[]', space=smem, size = 0x4, offset = 0x4, fixed_abs, tag = 'smem constant byte address 0x4 - core index']
  #allocation1 [shape = 'u32[72,128]{1,0:T(1,128)}', space=vmem, size = 0x9000, scoped, tag = 'internal scratch']
  %s0 = inlined_call_operand.hbm [shape: f32[256,128], index: 0, kind: input, shape index: {}]
  %s1 = inlined_call_operand.hbm [shape: bf16[128,128], index: 1, kind: input, shape index: {}]
  %s2 = inlined_call_operand.vmem [shape: f32[1,128], index: 2, kind: input, shape index: {}]
  %s3 = inlined_call_operand.hbm [shape: bf16[128,128], index: 3, kind: input, shape index: {}]
  %s4 = inlined_call_operand.vmem [shape: f32[1,128], index: 4, kind: input, shape index: {}]
  %s5 = inlined_call_operand.hbm [shape: bf16[128,128], index: 5, kind: input, shape index: {}]
  %s6 = inlined_call_operand.vmem [shape: f32[1,128], index: 6, kind: input, shape index: {}]
  %s7 = inlined_call_operand.hbm [shape: f32[256,128], index: 7, kind: output, shape index: {}]
  %s8 = sld [smem:[#allocation0]]
  $region54: #{tpu_custom_call.1} parent=0
    _
  %s10 = ssub.s32 1, %s8
  %s11 = scalar_select 0, %s10, %s8
  $region1: #{tpu_custom_call.1} parent=0
    #allocation2 [shape = 'u8[131072]{0}', space=vmem, size = 0x20000, scoped, tag = 'input window, operand 0, single buffered']
    #allocation3 [shape = 's32[1]{0}', space=sflag, size = 0x4, scoped, tag = 'scoped memory for tpu_custom_call.1']
    #allocation4 [shape = 's32[1]{0}', space=sflag, size = 0x4, scoped, tag = 'scoped memory for tpu_custom_call.1']
    #allocation5 [shape = 'u8[32768]{0}', space=vmem, size = 0x8000, scoped, tag = 'input window, operand 1, single buffered']
    #allocation6 [shape = 's32[1]{0}', space=sflag, size = 0x4, scoped, tag = 'scoped memory for tpu_custom_call.1']
    #allocation7 [shape = 'u8[32768]{0}', space=vmem, size = 0x8000, scoped, tag = 'input window, operand 3, single buffered']
    #allocation8 [shape = 'u8[32768]{0}', space=vmem, size = 0x8000, scoped, tag = 'input window, operand 5, single buffered']
    #allocation9 [shape = 's32[1]{0}', space=sflag, size = 0x4, scoped, tag = 'scoped memory for tpu_custom_call.1']
    #allocation10 [shape = 'u8[131072]{0}', space=vmem, size = 0x20000, scoped, tag = 'output window, operand 0, single buffered']
    %12 = vsyncpa [#allocation3], 0
    %13 = vsyncpa [#allocation6], 0
    %14 = vsyncpa [#allocation9], 0
    %15 = vsyncpa [#allocation4], 0
    // Predicated region
    $region2: #{tpu_custom_call.1} parent=1 // pred_check
      _
    $region3: #{tpu_custom_call.1} parent=1 // pred_check_branch
      %17 = sbr.rel (0) target = $region5
    $region4: #{tpu_custom_call.1} parent=1 // pred_region
      %19 = vsyncadd [#allocation3], 0
      %s20 = sshll.u32 %s0, 4
      %s21 = int_to_ptr.hbm [resolvable:$true] %s20
      %s22 = sshll.u32 [#allocation2], 4
      %s23 = int_to_ptr.vmem [resolvable:$true] %s22
      %28 = dma.hbm_to_vmem [thread:$0]  %s21, 4096, %s23, [#allocation3], 128, 128, 8
    $region5: #{tpu_custom_call.1} parent=1 // pred_fallthru
      _
    // Predicated region
    $region6: #{tpu_custom_call.1} parent=1 // pred_check
      _
    $region7: #{tpu_custom_call.1} parent=1 // pred_check_branch
      %30 = sbr.rel (0) target = $region9
    $region8: #{tpu_custom_call.1} parent=1 // pred_region
      %32 = vsyncadd [#allocation6], 0
      %s33 = sshll.u32 %s1, 4
      %s34 = int_to_ptr.hbm [resolvable:$true] %s33
      %s35 = sshll.u32 [#allocation5], 4
      %s36 = int_to_ptr.vmem [resolvable:$true] %s35
      %41 = dma.hbm_to_vmem [thread:$0]  %s34, 1024, %s36, [#allocation6], 64, 64, 4
    $region9: #{tpu_custom_call.1} parent=1 // pred_fallthru
      _
    // Predicated region
    $region10: #{tpu_custom_call.1} parent=1 // pred_check
      _
    $region11: #{tpu_custom_call.1} parent=1 // pred_check_branch
      %43 = sbr.rel (0) target = $region13
    $region12: #{tpu_custom_call.1} parent=1 // pred_region
      _
    $region13: #{tpu_custom_call.1} parent=1 // pred_fallthru
      _
    // Predicated region
    $region14: #{tpu_custom_call.1} parent=1 // pred_check
      _
    $region15: #{tpu_custom_call.1} parent=1 // pred_check_branch
      %45 = sbr.rel (0) target = $region17
    $region16: #{tpu_custom_call.1} parent=1 // pred_region
      %47 = vsyncadd [#allocation6], 0
      %s48 = sshll.u32 %s3, 4
      %s49 = int_to_ptr.hbm [resolvable:$true] %s48
      %s50 = sshll.u32 [#allocation7], 4
      %s51 = int_to_ptr.vmem [resolvable:$true] %s50
      %56 = dma.hbm_to_vmem [thread:$0]  %s49, 1024, %s51, [#allocation6], 64, 64, 4
    $region17: #{tpu_custom_call.1} parent=1 // pred_fallthru
      _
    // Predicated region
    $region18: #{tpu_custom_call.1} parent=1 // pred_check
      _
    $region19: #{tpu_custom_call.1} parent=1 // pred_check_branch
      %58 = sbr.rel (0) target = $region21
    $region20: #{tpu_custom_call.1} parent=1 // pred_region
      _
    $region21: #{tpu_custom_call.1} parent=1 // pred_fallthru
      _
    // Predicated region
    $region22: #{tpu_custom_call.1} parent=1 // pred_check
      _
    $region23: #{tpu_custom_call.1} parent=1 // pred_check_branch
      %60 = sbr.rel (0) target = $region25
    $region24: #{tpu_custom_call.1} parent=1 // pred_region
      %62 = vsyncadd [#allocation9], 0
      %s63 = sshll.u32 %s5, 4
      %s64 = int_to_ptr.hbm [resolvable:$true] %s63
      %s65 = sshll.u32 [#allocation8], 4
      %s66 = int_to_ptr.vmem [resolvable:$true] %s65
      %71 = dma.hbm_to_vmem [thread:$0]  %s64, 1024, %s66, [#allocation9], 64, 64, 4
    $region25: #{tpu_custom_call.1} parent=1 // pred_fallthru
      _
    // Predicated region
    $region26: #{tpu_custom_call.1} parent=1 // pred_check
      _
    $region27: #{tpu_custom_call.1} parent=1 // pred_check_branch
      %73 = sbr.rel (0) target = $region29
    $region28: #{tpu_custom_call.1} parent=1 // pred_region
      _
    $region29: #{tpu_custom_call.1} parent=1 // pred_fallthru
      _
    // Predicated region
    $region30: #{tpu_custom_call.1} parent=1 // pred_check
      _
    $region31: #{tpu_custom_call.1} parent=1 // pred_check_branch
      %75 = sbr.rel (0) target = $region33
    $region32: #{tpu_custom_call.1} parent=1 // pred_region
      %77 = dma.done [#allocation3], 4096
    $region33: #{tpu_custom_call.1} parent=1 // pred_fallthru
      _
    // Predicated region
    $region34: #{tpu_custom_call.1} parent=1 // pred_check
      _
    $region35: #{tpu_custom_call.1} parent=1 // pred_check_branch
      %79 = sbr.rel (0) target = $region37
    $region36: #{tpu_custom_call.1} parent=1 // pred_region
      %81 = dma.done [#allocation6], 1024
    $region37: #{tpu_custom_call.1} parent=1 // pred_fallthru
      _
    // Predicated region
    $region38: #{tpu_custom_call.1} parent=1 // pred_check
      _
    $region39: #{tpu_custom_call.1} parent=1 // pred_check_branch
      %83 = sbr.rel (0) target = $region41
    $region40: #{tpu_custom_call.1} parent=1 // pred_region
      %85 = dma.done [#allocation6], 1024
    $region41: #{tpu_custom_call.1} parent=1 // pred_fallthru
      _
    // Predicated region
    $region42: #{tpu_custom_call.1} parent=1 // pred_check
      _
    $region43: #{tpu_custom_call.1} parent=1 // pred_check_branch
      %87 = sbr.rel (0) target = $region45
    $region44: #{tpu_custom_call.1} parent=1 // pred_region
      %89 = dma.done [#allocation9], 1024
    $region45: #{tpu_custom_call.1} parent=1 // pred_fallthru
      _
    %v90 = vld [vmem:[#allocation2] sm:$0xff]
    %v91 = vld [vmem:[#allocation2 + $0x8] sm:$0xff]
    %v92 = vld [vmem:[#allocation2 + $0x10] sm:$0xff]
    %v93 = vld [vmem:[#allocation2 + $0x18] sm:$0xff]
    %v94 = vld [vmem:[#allocation2 + $0x20] sm:$0xff]
    %v95 = vld [vmem:[#allocation2 + $0x28] sm:$0xff]
    %v96 = vld [vmem:[#allocation2 + $0x30] sm:$0xff]
    %v97 = vld [vmem:[#allocation2 + $0x38] sm:$0xff]
    %v98 = vld [vmem:[#allocation2 + $0x40] sm:$0xff]
    %v99 = vld [vmem:[#allocation2 + $0x48] sm:$0xff]
    %v100 = vld [vmem:[#allocation2 + $0x50] sm:$0xff]
    %v101 = vld [vmem:[#allocation2 + $0x58] sm:$0xff]
    %v102 = vld [vmem:[#allocation2 + $0x60] sm:$0xff]
    %v103 = vld [vmem:[#allocation2 + $0x68] sm:$0xff]
    %v104 = vld [vmem:[#allocation2 + $0x70] sm:$0xff]
    %v105 = vld [vmem:[#allocation2 + $0x78] sm:$0xff]
    %v106 = vld [vmem:[#allocation2 + $0x80] sm:$0xff]
    %v107 = vld [vmem:[#allocation2 + $0x88] sm:$0xff]
    %v108 = vld [vmem:[#allocation2 + $0x90] sm:$0xff]
    %v109 = vld [vmem:[#allocation2 + $0x98] sm:$0xff]
    %v110 = vld [vmem:[#allocation2 + $0xa0] sm:$0xff]
    %v111 = vld [vmem:[#allocation2 + $0xa8] sm:$0xff]
    %v112 = vld [vmem:[#allocation2 + $0xb0] sm:$0xff]
    %v113 = vld [vmem:[#allocation2 + $0xb8] sm:$0xff]
    %v114 = vld [vmem:[#allocation2 + $0xc0] sm:$0xff]
    %v115 = vld [vmem:[#allocation2 + $0xc8] sm:$0xff]
    %v116 = vld [vmem:[#allocation2 + $0xd0] sm:$0xff]
    %v117 = vld [vmem:[#allocation2 + $0xd8] sm:$0xff]
    %v118 = vld [vmem:[#allocation2 + $0xe0] sm:$0xff]
    %v119 = vld [vmem:[#allocation2 + $0xe8] sm:$0xff]
    %v120 = vld [vmem:[#allocation2 + $0xf0] sm:$0xff]
    %v121 = vld [vmem:[#allocation2 + $0xf8] sm:$0xff]
    %v122 = vpack.c.bf16 %v91, %v90
    %v123 = vpack.c.bf16 %v93, %v92
    %v124 = vpack.c.bf16 %v95, %v94
    %v125 = vpack.c.bf16 %v97, %v96
    %v126 = vpack.c.bf16 %v99, %v98
    %v127 = vpack.c.bf16 %v101, %v100
    %v128 = vpack.c.bf16 %v103, %v102
    %v129 = vpack.c.bf16 %v105, %v104
    %v130 = vpack.c.bf16 %v107, %v106
    %v131 = vpack.c.bf16 %v109, %v108
    %v132 = vpack.c.bf16 %v111, %v110
    %v133 = vpack.c.bf16 %v113, %v112
    %v134 = vpack.c.bf16 %v115, %v114
    %v135 = vpack.c.bf16 %v117, %v116
    %v136 = vpack.c.bf16 %v119, %v118
    %v137 = vpack.c.bf16 %v121, %v120
    %v138 = vld [vmem:[#allocation5] sm:$0xf]
    %v139 = vld [vmem:[#allocation5 + $0x4] sm:$0xf]
    %v140 = vld [vmem:[#allocation5 + $0x8] sm:$0xf]
    %v141 = vld [vmem:[#allocation5 + $0xc] sm:$0xf]
    %v142 = vld [vmem:[#allocation5 + $0x10] sm:$0xf]
    %v143 = vld [vmem:[#allocation5 + $0x14] sm:$0xf]
    %v144 = vld [vmem:[#allocation5 + $0x18] sm:$0xf]
    %v145 = vld [vmem:[#allocation5 + $0x1c] sm:$0xf]
    %v146 = vld [vmem:[#allocation5 + $0x20] sm:$0xf]
    %v147 = vld [vmem:[#allocation5 + $0x24] sm:$0xf]
    %v148 = vld [vmem:[#allocation5 + $0x28] sm:$0xf]
    %v149 = vld [vmem:[#allocation5 + $0x2c] sm:$0xf]
    %v150 = vld [vmem:[#allocation5 + $0x30] sm:$0xf]
    %v151 = vld [vmem:[#allocation5 + $0x34] sm:$0xf]
    %v152 = vld [vmem:[#allocation5 + $0x38] sm:$0xf]
    %v153 = vld [vmem:[#allocation5 + $0x3c] sm:$0xf]
    %v154 = vld [vmem:[%s2] sm:$0x1]
    %v156 = vperm.slane %v154, 0
    %v174 = vunpack.c.l.b16 %v138
    %v175 = vunpack.c.l.b16 %v139
    %v176 = vunpack.c.l.b16 %v140
    %v177 = vunpack.c.l.b16 %v141
    %v178 = vunpack.c.l.b16 %v142
    %v179 = vunpack.c.l.b16 %v143
    %v180 = vunpack.c.l.b16 %v144
    %v181 = vunpack.c.l.b16 %v145
    %v182 = vunpack.c.l.b16 %v146
    %v183 = vunpack.c.l.b16 %v147
    %v184 = vunpack.c.l.b16 %v148
    %v185 = vunpack.c.l.b16 %v149
    %v186 = vunpack.c.l.b16 %v150
    %v187 = vunpack.c.l.b16 %v151
    %v188 = vunpack.c.l.b16 %v152
    %v189 = vunpack.c.l.b16 %v153
    %v190 = vpack.c.b16 %v175, %v174
    %v191 = vpack.c.b16 %v177, %v176
    %v192 = vpack.c.b16 %v179, %v178
    %v193 = vpack.c.b16 %v181, %v180
    %v194 = vpack.c.b16 %v183, %v182
    %v195 = vpack.c.b16 %v185, %v184
    %v196 = vpack.c.b16 %v187, %v186
    %v197 = vpack.c.b16 %v189, %v188
    %206 = vmatpush.bf16.msra.mxu0 %v197
    %207 = vmatpush.bf16.msra.mxu0 %v196
    %208 = vmatpush.bf16.msra.mxu0 %v195
    %209 = vmatpush.bf16.msra.mxu0 %v194
    %210 = vmatpush.bf16.msra.mxu0 %v193
    %211 = vmatpush.bf16.msra.mxu0 %v192
    %212 = vmatpush.bf16.msra.mxu0 %v191
    %213 = vmatpush.bf16.msra.mxu0 %v190
    %214 = vmatmul.bf16.gmra.mxu0 %v122
    %v215 = vpop.f32.mrf.mxu0
    %v216 = vadd.f32 %v156, %v215
    %v217 = vpop.f32.mrf.mxu0
    %v218 = vadd.f32 %v156, %v217
    %219 = vmatmul.bf16.gmra.mxu0 %v123
    %v220 = vpop.f32.mrf.mxu0
    %v221 = vadd.f32 %v156, %v220
    %v222 = vpop.f32.mrf.mxu0
    %v223 = vadd.f32 %v156, %v222
    %224 = vmatmul.bf16.gmra.mxu0 %v124
    %v225 = vpop.f32.mrf.mxu0
    %v226 = vadd.f32 %v156, %v225
    %v227 = vpop.f32.mrf.mxu0
    %v228 = vadd.f32 %v156, %v227
    %229 = vmatmul.bf16.gmra.mxu0 %v125
    %v230 = vpop.f32.mrf.mxu0
    %v231 = vadd.f32 %v156, %v230
    %v232 = vpop.f32.mrf.mxu0
    %v233 = vadd.f32 %v156, %v232
    %234 = vmatmul.bf16.gmra.mxu0 %v126
    %v235 = vpop.f32.mrf.mxu0
    %v236 = vadd.f32 %v156, %v235
    %v237 = vpop.f32.mrf.mxu0
    %v238 = vadd.f32 %v156, %v237
    %239 = vmatmul.bf16.gmra.mxu0 %v127
    %v240 = vpop.f32.mrf.mxu0
    %v241 = vadd.f32 %v156, %v240
    %v242 = vpop.f32.mrf.mxu0
    %v243 = vadd.f32 %v156, %v242
    %244 = vmatmul.bf16.gmra.mxu0 %v128
    %v245 = vpop.f32.mrf.mxu0
    %v246 = vadd.f32 %v156, %v245
    %v247 = vpop.f32.mrf.mxu0
    %v248 = vadd.f32 %v156, %v247
    %249 = vmatmul.bf16.gmra.mxu0 %v129
    %v250 = vpop.f32.mrf.mxu0
    %v251 = vadd.f32 %v156, %v250
    %v252 = vpop.f32.mrf.mxu0
    %v253 = vadd.f32 %v156, %v252
    %254 = vmatmul.bf16.gmra.mxu0 %v130
    %v255 = vpop.f32.mrf.mxu0
    %v256 = vadd.f32 %v156, %v255
    %v257 = vpop.f32.mrf.mxu0
    %v258 = vadd.f32 %v156, %v257
    %259 = vmatmul.bf16.gmra.mxu0 %v131
    %v260 = vpop.f32.mrf.mxu0
    %v261 = vadd.f32 %v156, %v260
    %v262 = vpop.f32.mrf.mxu0
    %v263 = vadd.f32 %v156, %v262
    %264 = vmatmul.bf16.gmra.mxu0 %v132
    %v265 = vpop.f32.mrf.mxu0
    %v266 = vadd.f32 %v156, %v265
    %v267 = vpop.f32.mrf.mxu0
    %v268 = vadd.f32 %v156, %v267
    %269 = vmatmul.bf16.gmra.mxu0 %v133
    %v270 = vpop.f32.mrf.mxu0
    %v271 = vadd.f32 %v156, %v270
    %v272 = vpop.f32.mrf.mxu0
    %v273 = vadd.f32 %v156, %v272
    %274 = vmatmul.bf16.gmra.mxu0 %v134
    %v275 = vpop.f32.mrf.mxu0
    %v276 = vadd.f32 %v156, %v275
    %v277 = vpop.f32.mrf.mxu0
    %v278 = vadd.f32 %v156, %v277
    %279 = vmatmul.bf16.gmra.mxu0 %v135
    %v280 = vpop.f32.mrf.mxu0
    %v281 = vadd.f32 %v156, %v280
    %v282 = vpop.f32.mrf.mxu0
    %v283 = vadd.f32 %v156, %v282
    %284 = vmatmul.bf16.gmra.mxu0 %v136
    %v285 = vpop.f32.mrf.mxu0
    %v286 = vadd.f32 %v156, %v285
    %v287 = vpop.f32.mrf.mxu0
    %v288 = vadd.f32 %v156, %v287
    %289 = vmatmul.bf16.gmra.mxu0 %v137
    %v290 = vpop.f32.mrf.mxu0
    %v291 = vadd.f32 %v156, %v290
    %v292 = vpop.f32.mrf.mxu0
    %v293 = vadd.f32 %v156, %v292
    %294 = vdwg.mxu0
    %v295 = vmax.f32 %v216, 0.0
    %v296 = vmax.f32 %v218, 0.0
    %v297 = vmax.f32 %v221, 0.0
    %v298 = vmax.f32 %v223, 0.0
    %v299 = vmax.f32 %v226, 0.0
    %v300 = vmax.f32 %v228, 0.0
    %v301 = vmax.f32 %v231, 0.0
    %v302 = vmax.f32 %v233, 0.0
    %v303 = vmax.f32 %v236, 0.0
    %v304 = vmax.f32 %v238, 0.0
    %v305 = vmax.f32 %v241, 0.0
    %v306 = vmax.f32 %v243, 0.0
    %v307 = vmax.f32 %v246, 0.0
    %v308 = vmax.f32 %v248, 0.0
    %v309 = vmax.f32 %v251, 0.0
    %v310 = vmax.f32 %v253, 0.0
    %v311 = vmax.f32 %v256, 0.0
    %v312 = vmax.f32 %v258, 0.0
    %v313 = vmax.f32 %v261, 0.0
    %v314 = vmax.f32 %v263, 0.0
    %v315 = vmax.f32 %v266, 0.0
    %v316 = vmax.f32 %v268, 0.0
    %v317 = vmax.f32 %v271, 0.0
    %v318 = vmax.f32 %v273, 0.0
    %v319 = vmax.f32 %v276, 0.0
    %v320 = vmax.f32 %v278, 0.0
    %v321 = vmax.f32 %v281, 0.0
    %v322 = vmax.f32 %v283, 0.0
    %v323 = vmax.f32 %v286, 0.0
    %v324 = vmax.f32 %v288, 0.0
    %v325 = vmax.f32 %v291, 0.0
    %v326 = vmax.f32 %v293, 0.0
    %v327 = vpack.c.bf16 %v296, %v295
    %v328 = vpack.c.bf16 %v298, %v297
    %v329 = vpack.c.bf16 %v300, %v299
    %v330 = vpack.c.bf16 %v302, %v301
    %v331 = vpack.c.bf16 %v304, %v303
    %v332 = vpack.c.bf16 %v306, %v305
    %v333 = vpack.c.bf16 %v308, %v307
    %v334 = vpack.c.bf16 %v310, %v309
    %v335 = vpack.c.bf16 %v312, %v311
    %v336 = vpack.c.bf16 %v314, %v313
    %v337 = vpack.c.bf16 %v316, %v315
    %v338 = vpack.c.bf16 %v318, %v317
    %v339 = vpack.c.bf16 %v320, %v319
    %v340 = vpack.c.bf16 %v322, %v321
    %v341 = vpack.c.bf16 %v324, %v323
    %v342 = vpack.c.bf16 %v326, %v325
    %v343 = vld [vmem:[#allocation7] sm:$0xf]
    %v344 = vld [vmem:[#allocation7 + $0x4] sm:$0xf]
    %v345 = vld [vmem:[#allocation7 + $0x8] sm:$0xf]
    %v346 = vld [vmem:[#allocation7 + $0xc] sm:$0xf]
    %v347 = vld [vmem:[#allocation7 + $0x10] sm:$0xf]
    %v348 = vld [vmem:[#allocation7 + $0x14] sm:$0xf]
    %v349 = vld [vmem:[#allocation7 + $0x18] sm:$0xf]
    %v350 = vld [vmem:[#allocation7 + $0x1c] sm:$0xf]
    %v351 = vld [vmem:[#allocation7 + $0x20] sm:$0xf]
    %v352 = vld [vmem:[#allocation7 + $0x24] sm:$0xf]
    %v353 = vld [vmem:[#allocation7 + $0x28] sm:$0xf]
    %v354 = vld [vmem:[#allocation7 + $0x2c] sm:$0xf]
    %v355 = vld [vmem:[#allocation7 + $0x30] sm:$0xf]
    %v356 = vld [vmem:[#allocation7 + $0x34] sm:$0xf]
    %v357 = vld [vmem:[#allocation7 + $0x38] sm:$0xf]
    %v358 = vld [vmem:[#allocation7 + $0x3c] sm:$0xf]
    %v359 = vld [vmem:[%s4] sm:$0x1]
    %v361 = vperm.slane %v359, 0
    %v379 = vunpack.c.l.b16 %v343
    %v380 = vunpack.c.l.b16 %v344
    %v381 = vunpack.c.l.b16 %v345
    %v382 = vunpack.c.l.b16 %v346
    %v383 = vunpack.c.l.b16 %v347
    %v384 = vunpack.c.l.b16 %v348
    %v385 = vunpack.c.l.b16 %v349
    %v386 = vunpack.c.l.b16 %v350
    %v387 = vunpack.c.l.b16 %v351
    %v388 = vunpack.c.l.b16 %v352
    %v389 = vunpack.c.l.b16 %v353
    %v390 = vunpack.c.l.b16 %v354
    %v391 = vunpack.c.l.b16 %v355
    %v392 = vunpack.c.l.b16 %v356
    %v393 = vunpack.c.l.b16 %v357
    %v394 = vunpack.c.l.b16 %v358
    %v395 = vpack.c.b16 %v380, %v379
    %v396 = vpack.c.b16 %v382, %v381
    %v397 = vpack.c.b16 %v384, %v383
    %v398 = vpack.c.b16 %v386, %v385
    %v399 = vpack.c.b16 %v388, %v387
    %v400 = vpack.c.b16 %v390, %v389
    %v401 = vpack.c.b16 %v392, %v391
    %v402 = vpack.c.b16 %v394, %v393
    %411 = vmatpush.bf16.msra.mxu0 %v402
    %412 = vmatpush.bf16.msra.mxu0 %v401
    %413 = vmatpush.bf16.msra.mxu0 %v400
    %414 = vmatpush.bf16.msra.mxu0 %v399
    %415 = vmatpush.bf16.msra.mxu0 %v398
    %416 = vmatpush.bf16.msra.mxu0 %v397
    %417 = vmatpush.bf16.msra.mxu0 %v396
    %418 = vmatpush.bf16.msra.mxu0 %v395
    %419 = vmatmul.bf16.gmra.mxu0 %v327
    %v420 = vpop.f32.mrf.mxu0
    %v421 = vadd.f32 %v361, %v420
    %v422 = vpop.f32.mrf.mxu0
    %v423 = vadd.f32 %v361, %v422
    %424 = vmatmul.bf16.gmra.mxu0 %v328
    %v425 = vpop.f32.mrf.mxu0
    %v426 = vadd.f32 %v361, %v425
    %v427 = vpop.f32.mrf.mxu0
    %v428 = vadd.f32 %v361, %v427
    %429 = vmatmul.bf16.gmra.mxu0 %v329
    %v430 = vpop.f32.mrf.mxu0
    %v431 = vadd.f32 %v361, %v430
    %v432 = vpop.f32.mrf.mxu0
    %v433 = vadd.f32 %v361, %v432
    %434 = vmatmul.bf16.gmra.mxu0 %v330
    %v435 = vpop.f32.mrf.mxu0
    %v436 = vadd.f32 %v361, %v435
    %v437 = vpop.f32.mrf.mxu0
    %v438 = vadd.f32 %v361, %v437
    %439 = vmatmul.bf16.gmra.mxu0 %v331
    %v440 = vpop.f32.mrf.mxu0
    %v441 = vadd.f32 %v361, %v440
    %v442 = vpop.f32.mrf.mxu0
    %v443 = vadd.f32 %v361, %v442
    %444 = vmatmul.bf16.gmra.mxu0 %v332
    %v445 = vpop.f32.mrf.mxu0
    %v446 = vadd.f32 %v361, %v445
    %v447 = vpop.f32.mrf.mxu0
    %v448 = vadd.f32 %v361, %v447
    %449 = vmatmul.bf16.gmra.mxu0 %v333
    %v450 = vpop.f32.mrf.mxu0
    %v451 = vadd.f32 %v361, %v450
    %v452 = vpop.f32.mrf.mxu0
    %v453 = vadd.f32 %v361, %v452
    %454 = vmatmul.bf16.gmra.mxu0 %v334
    %v455 = vpop.f32.mrf.mxu0
    %v456 = vadd.f32 %v361, %v455
    %v457 = vpop.f32.mrf.mxu0
    %v458 = vadd.f32 %v361, %v457
    %459 = vmatmul.bf16.gmra.mxu0 %v335
    %v460 = vpop.f32.mrf.mxu0
    %v461 = vadd.f32 %v361, %v460
    %v462 = vpop.f32.mrf.mxu0
    %v463 = vadd.f32 %v361, %v462
    %464 = vmatmul.bf16.gmra.mxu0 %v336
    %v465 = vpop.f32.mrf.mxu0
    %v466 = vadd.f32 %v361, %v465
    %v467 = vpop.f32.mrf.mxu0
    %v468 = vadd.f32 %v361, %v467
    %469 = vmatmul.bf16.gmra.mxu0 %v337
    %v470 = vpop.f32.mrf.mxu0
    %v471 = vadd.f32 %v361, %v470
    %v472 = vpop.f32.mrf.mxu0
    %v473 = vadd.f32 %v361, %v472
    %474 = vmatmul.bf16.gmra.mxu0 %v338
    %v475 = vpop.f32.mrf.mxu0
    %v476 = vadd.f32 %v361, %v475
    %v477 = vpop.f32.mrf.mxu0
    %v478 = vadd.f32 %v361, %v477
    %479 = vmatmul.bf16.gmra.mxu0 %v339
    %v480 = vpop.f32.mrf.mxu0
    %v481 = vadd.f32 %v361, %v480
    %v482 = vpop.f32.mrf.mxu0
    %v483 = vadd.f32 %v361, %v482
    %484 = vmatmul.bf16.gmra.mxu0 %v340
    %v485 = vpop.f32.mrf.mxu0
    %v486 = vadd.f32 %v361, %v485
    %v487 = vpop.f32.mrf.mxu0
    %v488 = vadd.f32 %v361, %v487
    %489 = vmatmul.bf16.gmra.mxu0 %v341
    %v490 = vpop.f32.mrf.mxu0
    %v491 = vadd.f32 %v361, %v490
    %v492 = vpop.f32.mrf.mxu0
    %v493 = vadd.f32 %v361, %v492
    %494 = vmatmul.bf16.gmra.mxu0 %v342
    %v495 = vpop.f32.mrf.mxu0
    %v496 = vadd.f32 %v361, %v495
    %v497 = vpop.f32.mrf.mxu0
    %v498 = vadd.f32 %v361, %v497
    %499 = vdwg.mxu0
    %v500 = vmax.f32 %v421, 0.0
    %v501 = vmax.f32 %v423, 0.0
    %v502 = vmax.f32 %v426, 0.0
    %v503 = vmax.f32 %v428, 0.0
    %v504 = vmax.f32 %v431, 0.0
    %v505 = vmax.f32 %v433, 0.0
    %v506 = vmax.f32 %v436, 0.0
    %v507 = vmax.f32 %v438, 0.0
    %v508 = vmax.f32 %v441, 0.0
    %v509 = vmax.f32 %v443, 0.0
    %v510 = vmax.f32 %v446, 0.0
    %v511 = vmax.f32 %v448, 0.0
    %v512 = vmax.f32 %v451, 0.0
    %v513 = vmax.f32 %v453, 0.0
    %v514 = vmax.f32 %v456, 0.0
    %v515 = vmax.f32 %v458, 0.0
    %v516 = vmax.f32 %v461, 0.0
    %v517 = vmax.f32 %v463, 0.0
    %v518 = vmax.f32 %v466, 0.0
    %v519 = vmax.f32 %v468, 0.0
    %v520 = vmax.f32 %v471, 0.0
    %v521 = vmax.f32 %v473, 0.0
    %v522 = vmax.f32 %v476, 0.0
    %v523 = vmax.f32 %v478, 0.0
    %v524 = vmax.f32 %v481, 0.0
    %v525 = vmax.f32 %v483, 0.0
    %v526 = vmax.f32 %v486, 0.0
    %v527 = vmax.f32 %v488, 0.0
    %v528 = vmax.f32 %v491, 0.0
    %v529 = vmax.f32 %v493, 0.0
    %v530 = vmax.f32 %v496, 0.0
    %v531 = vmax.f32 %v498, 0.0
    %v532 = vpack.c.bf16 %v501, %v500
    %v533 = vpack.c.bf16 %v503, %v502
    %v534 = vpack.c.bf16 %v505, %v504
    %v535 = vpack.c.bf16 %v507, %v506
    %v536 = vpack.c.bf16 %v509, %v508
    %v537 = vpack.c.bf16 %v511, %v510
    %v538 = vpack.c.bf16 %v513, %v512
    %v539 = vpack.c.bf16 %v515, %v514
    %v540 = vpack.c.bf16 %v517, %v516
    %v541 = vpack.c.bf16 %v519, %v518
    %v542 = vpack.c.bf16 %v521, %v520
    %v543 = vpack.c.bf16 %v523, %v522
    %v544 = vpack.c.bf16 %v525, %v524
    %v545 = vpack.c.bf16 %v527, %v526
    %v546 = vpack.c.bf16 %v529, %v528
    %v547 = vpack.c.bf16 %v531, %v530
    %v548 = vld [vmem:[#allocation8] sm:$0xf]
    %v549 = vld [vmem:[#allocation8 + $0x4] sm:$0xf]
    %v550 = vld [vmem:[#allocation8 + $0x8] sm:$0xf]
    %v551 = vld [vmem:[#allocation8 + $0xc] sm:$0xf]
    %v552 = vld [vmem:[#allocation8 + $0x10] sm:$0xf]
    %v553 = vld [vmem:[#allocation8 + $0x14] sm:$0xf]
    %v554 = vld [vmem:[#allocation8 + $0x18] sm:$0xf]
    %v555 = vld [vmem:[#allocation8 + $0x1c] sm:$0xf]
    %v556 = vld [vmem:[#allocation8 + $0x20] sm:$0xf]
    %v557 = vld [vmem:[#allocation8 + $0x24] sm:$0xf]
    %v558 = vld [vmem:[#allocation8 + $0x28] sm:$0xf]
    %v559 = vld [vmem:[#allocation8 + $0x2c] sm:$0xf]
    %v560 = vld [vmem:[#allocation8 + $0x30] sm:$0xf]
    %v561 = vld [vmem:[#allocation8 + $0x34] sm:$0xf]
    %v562 = vld [vmem:[#allocation8 + $0x38] sm:$0xf]
    %v563 = vld [vmem:[#allocation8 + $0x3c] sm:$0xf]
    %v564 = vld [vmem:[%s6] sm:$0x1]
    %v566 = vperm.slane %v564, 0
    %v584 = vunpack.c.l.b16 %v548
    %v585 = vunpack.c.l.b16 %v549
    %v586 = vunpack.c.l.b16 %v550
    %v587 = vunpack.c.l.b16 %v551
    %v588 = vunpack.c.l.b16 %v552
    %v589 = vunpack.c.l.b16 %v553
    %v590 = vunpack.c.l.b16 %v554
    %v591 = vunpack.c.l.b16 %v555
    %v592 = vunpack.c.l.b16 %v556
    %v593 = vunpack.c.l.b16 %v557
    %v594 = vunpack.c.l.b16 %v558
    %v595 = vunpack.c.l.b16 %v559
    %v596 = vunpack.c.l.b16 %v560
    %v597 = vunpack.c.l.b16 %v561
    %v598 = vunpack.c.l.b16 %v562
    %v599 = vunpack.c.l.b16 %v563
    %v600 = vpack.c.b16 %v585, %v584
    %v601 = vpack.c.b16 %v587, %v586
    %v602 = vpack.c.b16 %v589, %v588
    %v603 = vpack.c.b16 %v591, %v590
    %v604 = vpack.c.b16 %v593, %v592
    %v605 = vpack.c.b16 %v595, %v594
    %v606 = vpack.c.b16 %v597, %v596
    %v607 = vpack.c.b16 %v599, %v598
    %616 = vmatpush.bf16.msra.mxu0 %v607
    %617 = vmatpush.bf16.msra.mxu0 %v606
    %618 = vmatpush.bf16.msra.mxu0 %v605
    %619 = vmatpush.bf16.msra.mxu0 %v604
    %620 = vmatpush.bf16.msra.mxu0 %v603
    %621 = vmatpush.bf16.msra.mxu0 %v602
    %622 = vmatpush.bf16.msra.mxu0 %v601
    %623 = vmatpush.bf16.msra.mxu0 %v600
    %624 = vmatmul.bf16.gmra.mxu0 %v532
    %v625 = vpop.f32.mrf.mxu0
    %v626 = vadd.f32 %v566, %v625
    %v627 = vpop.f32.mrf.mxu0
    %v628 = vadd.f32 %v566, %v627
    %629 = vmatmul.bf16.gmra.mxu0 %v533
    %v630 = vpop.f32.mrf.mxu0
    %v631 = vadd.f32 %v566, %v630
    %v632 = vpop.f32.mrf.mxu0
    %v633 = vadd.f32 %v566, %v632
    %634 = vmatmul.bf16.gmra.mxu0 %v534
    %v635 = vpop.f32.mrf.mxu0
    %v636 = vadd.f32 %v566, %v635
    %v637 = vpop.f32.mrf.mxu0
    %v638 = vadd.f32 %v566, %v637
    %639 = vmatmul.bf16.gmra.mxu0 %v535
    %v640 = vpop.f32.mrf.mxu0
    %v641 = vadd.f32 %v566, %v640
    %v642 = vpop.f32.mrf.mxu0
    %v643 = vadd.f32 %v566, %v642
    %644 = vmatmul.bf16.gmra.mxu0 %v536
    %v645 = vpop.f32.mrf.mxu0
    %v646 = vadd.f32 %v566, %v645
    %v647 = vpop.f32.mrf.mxu0
    %v648 = vadd.f32 %v566, %v647
    %649 = vmatmul.bf16.gmra.mxu0 %v537
    %v650 = vpop.f32.mrf.mxu0
    %v651 = vadd.f32 %v566, %v650
    %v652 = vpop.f32.mrf.mxu0
    %v653 = vadd.f32 %v566, %v652
    %654 = vmatmul.bf16.gmra.mxu0 %v538
    %v655 = vpop.f32.mrf.mxu0
    %v656 = vadd.f32 %v566, %v655
    %v657 = vpop.f32.mrf.mxu0
    %v658 = vadd.f32 %v566, %v657
    %659 = vmatmul.bf16.gmra.mxu0 %v539
    %v660 = vpop.f32.mrf.mxu0
    %v661 = vadd.f32 %v566, %v660
    %v662 = vpop.f32.mrf.mxu0
    %v663 = vadd.f32 %v566, %v662
    %664 = vmatmul.bf16.gmra.mxu0 %v540
    %v665 = vpop.f32.mrf.mxu0
    %v666 = vadd.f32 %v566, %v665
    %v667 = vpop.f32.mrf.mxu0
    %v668 = vadd.f32 %v566, %v667
    %669 = vmatmul.bf16.gmra.mxu0 %v541
    %v670 = vpop.f32.mrf.mxu0
    %v671 = vadd.f32 %v566, %v670
    %v672 = vpop.f32.mrf.mxu0
    %v673 = vadd.f32 %v566, %v672
    %674 = vmatmul.bf16.gmra.mxu0 %v542
    %v675 = vpop.f32.mrf.mxu0
    %v676 = vadd.f32 %v566, %v675
    %v677 = vpop.f32.mrf.mxu0
    %v678 = vadd.f32 %v566, %v677
    %679 = vmatmul.bf16.gmra.mxu0 %v543
    %v680 = vpop.f32.mrf.mxu0
    %v681 = vadd.f32 %v566, %v680
    %v682 = vpop.f32.mrf.mxu0
    %v683 = vadd.f32 %v566, %v682
    %684 = vmatmul.bf16.gmra.mxu0 %v544
    %v685 = vpop.f32.mrf.mxu0
    %v686 = vadd.f32 %v566, %v685
    %v687 = vpop.f32.mrf.mxu0
    %v688 = vadd.f32 %v566, %v687
    %689 = vmatmul.bf16.gmra.mxu0 %v545
    %v690 = vpop.f32.mrf.mxu0
    %v691 = vadd.f32 %v566, %v690
    %v692 = vpop.f32.mrf.mxu0
    %v693 = vadd.f32 %v566, %v692
    %694 = vmatmul.bf16.gmra.mxu0 %v546
    %v695 = vpop.f32.mrf.mxu0
    %v696 = vadd.f32 %v566, %v695
    %v697 = vpop.f32.mrf.mxu0
    %v698 = vadd.f32 %v566, %v697
    %699 = vmatmul.bf16.gmra.mxu0 %v547
    %v700 = vpop.f32.mrf.mxu0
    %v701 = vadd.f32 %v566, %v700
    %v702 = vpop.f32.mrf.mxu0
    %v703 = vadd.f32 %v566, %v702
    %704 = vdwg.mxu0
    %705 = vst [vmem:[#allocation10] sm:$0xff] %v626
    %706 = vst [vmem:[#allocation10 + $0x8] sm:$0xff] %v628
    %707 = vst [vmem:[#allocation10 + $0x10] sm:$0xff] %v631
    %708 = vst [vmem:[#allocation10 + $0x18] sm:$0xff] %v633
    %709 = vst [vmem:[#allocation10 + $0x20] sm:$0xff] %v636
    %710 = vst [vmem:[#allocation10 + $0x28] sm:$0xff] %v638
    %711 = vst [vmem:[#allocation10 + $0x30] sm:$0xff] %v641
    %712 = vst [vmem:[#allocation10 + $0x38] sm:$0xff] %v643
    %713 = vst [vmem:[#allocation10 + $0x40] sm:$0xff] %v646
    %714 = vst [vmem:[#allocation10 + $0x48] sm:$0xff] %v648
    %715 = vst [vmem:[#allocation10 + $0x50] sm:$0xff] %v651
    %716 = vst [vmem:[#allocation10 + $0x58] sm:$0xff] %v653
    %717 = vst [vmem:[#allocation10 + $0x60] sm:$0xff] %v656
    %718 = vst [vmem:[#allocation10 + $0x68] sm:$0xff] %v658
    %719 = vst [vmem:[#allocation10 + $0x70] sm:$0xff] %v661
    %720 = vst [vmem:[#allocation10 + $0x78] sm:$0xff] %v663
    %721 = vst [vmem:[#allocation10 + $0x80] sm:$0xff] %v666
    %722 = vst [vmem:[#allocation10 + $0x88] sm:$0xff] %v668
    %723 = vst [vmem:[#allocation10 + $0x90] sm:$0xff] %v671
    %724 = vst [vmem:[#allocation10 + $0x98] sm:$0xff] %v673
    %725 = vst [vmem:[#allocation10 + $0xa0] sm:$0xff] %v676
    %726 = vst [vmem:[#allocation10 + $0xa8] sm:$0xff] %v678
    %727 = vst [vmem:[#allocation10 + $0xb0] sm:$0xff] %v681
    %728 = vst [vmem:[#allocation10 + $0xb8] sm:$0xff] %v683
    %729 = vst [vmem:[#allocation10 + $0xc0] sm:$0xff] %v686
    %730 = vst [vmem:[#allocation10 + $0xc8] sm:$0xff] %v688
    %731 = vst [vmem:[#allocation10 + $0xd0] sm:$0xff] %v691
    %732 = vst [vmem:[#allocation10 + $0xd8] sm:$0xff] %v693
    %733 = vst [vmem:[#allocation10 + $0xe0] sm:$0xff] %v696
    %734 = vst [vmem:[#allocation10 + $0xe8] sm:$0xff] %v698
    %735 = vst [vmem:[#allocation10 + $0xf0] sm:$0xff] %v701
    %736 = vst [vmem:[#allocation10 + $0xf8] sm:$0xff] %v703
    // Predicated region
    $region46: #{tpu_custom_call.1} parent=1 // pred_check
      _
    $region47: #{tpu_custom_call.1} parent=1 // pred_check_branch
      %738 = sbr.rel (0) target = $region49
    $region48: #{tpu_custom_call.1} parent=1 // pred_region
      %740 = vsyncadd [#allocation4], 0
      %s741 = sshll.u32 [#allocation10], 4
      %s742 = int_to_ptr.vmem [resolvable:$true] %s741
      %s743 = sshll.u32 %s7, 4
      %s744 = int_to_ptr.hbm [resolvable:$true] %s743
      %749 = dma.vmem_to_hbm [thread:$0]  %s742, 4096, %s744, [#allocation4], 128, 128, 8
    $region49: #{tpu_custom_call.1} parent=1 // pred_fallthru
      _
    // Predicated region
    $region50: #{tpu_custom_call.1} parent=1 // pred_check
      _
    $region51: #{tpu_custom_call.1} parent=1 // pred_check_branch
      %751 = sbr.rel (0) target = $region53
    $region52: #{tpu_custom_call.1} parent=1 // pred_region
      %753 = dma.done [#allocation4], 4096
    $region53: #{tpu_custom_call.1} parent=1 // pred_fallthru
      _
    %754 = vsyncpa [#allocation3], 1
    %755 = vsyncpa [#allocation6], 1
    %756 = vsyncpa [#allocation9], 1
    %757 = vsyncpa [#allocation4], 1

</llo_original>
